<compile_context>
chip_gen: v5e
topology: v5e:2x2
jax: 0.10.0
libtpu: 0.0.40
codegen_flags: <defaults>
</compile_context>

<pallas_src>
import functools

import jax
import jax.numpy as jnp
from jax.experimental import pallas as pl
from jax.experimental.pallas import tpu as pltpu


def _round_up(x, m):
    return ((x + m - 1) // m) * m


def _resnet_block_kernel(x_ref, w1_ref, b1_ref, w2_ref, b2_ref, mask_ref,
                         o_ref, shift_ref, *, H, W, C, margin, eps):
    HW = H * W
    op_dtype = x_ref.dtype
    inv_hw = 1.0 / HW

    # Static 3x3 tap offsets, kh-major: tap t = kh*3 + kw  <->  (dh, dw) = (kh-1, kw-1).
    # Matches the (9, C_out, C_in) weight layout and the (9, 1, HW) mask layout built in
    # the wrapper.
    offsets = [(kh - 1, kw - 1) for kh in range(3) for kw in range(3)]

    # Load the 9 validity masks once (reused by both convs).  Every position that would
    # read outside the H x W interior (including the never-initialized scratch margins and
    # cross-row wrap-around of the flattened index) is masked to zero *before* it reaches
    # any arithmetic — so the shift scratch never needs zero-filling.
    valid = [mask_ref[t] != 0.0 for t in range(9)]          # 9 x (1, HW) bool

    def conv3x3(w_ref, b_ref):
        # 3x3 conv as 9 accumulated (C, C) x (C, HW) MXU matmuls over shifted lane windows.
        acc = jnp.zeros((C, HW), jnp.float32)
        for t, (dh, dw) in enumerate(offsets):
            start = margin + dh * W + dw                     # static python int, >= 0
            tap = shift_ref[:, pl.ds(start, HW)]             # (C, HW) f32
            tap = jnp.where(valid[t], tap, 0.0)
            acc = acc + jnp.dot(w_ref[t], tap.astype(op_dtype),
                                preferred_element_type=jnp.float32)
        return acc + b_ref[...].astype(jnp.float32)          # + (C, 1) bias

    def instance_norm(y):
        # Two-pass stats (more stable than E[y^2] - mean^2); biased variance, no affine.
        mean = jnp.sum(y, axis=1, keepdims=True) * inv_hw    # (C, 1)
        yc = y - mean
        var = jnp.sum(yc * yc, axis=1, keepdims=True) * inv_hw
        return yc * jax.lax.rsqrt(var + eps)

    x_cf = x_ref[0]                                          # (C, HW), channel-major

    # conv1 -> InstanceNorm -> ReLU.  Interior store is lane-aligned (margin % 128 == 0).
    shift_ref[:, pl.ds(margin, HW)] = x_cf.astype(jnp.float32)
    h = jnp.maximum(instance_norm(conv3x3(w1_ref, b1_ref)), 0.0)   # (C, HW) f32

    # conv2 -> InstanceNorm (no ReLU).  conv2 input stays f32 in the scratch.
    shift_ref[:, pl.ds(margin, HW)] = h
    y2 = instance_norm(conv3x3(w2_ref, b2_ref))

    # Residual add; lane-dense (C, HW) store.
    o_ref[0] = (x_cf.astype(jnp.float32) + y2).astype(o_ref.dtype)


def resnet_block_forward(x_nchw, w1, b1, w2, b2, *, eps=1e-5):
    """x: (N, C, H, W); w1, w2: (C, C, 3, 3) [out, in, kh, kw]; b1, b2: (C,)."""
    N, C, H, W = x_nchw.shape
    HW = H * W
    margin = _round_up(W + 1, 128)          # aligned interior offset, covers |shift| <= W+1
    op_dtype = x_nchw.dtype

    # Free reshapes only (no pad / transpose HBM passes).  Weights -> (9, C_out, C_in),
    # tap-major; operands kept in the input dtype (bf16-ready), biases f32.
    x_flat = x_nchw.reshape(N, C, HW)
    w1_t = jnp.transpose(w1, (2, 3, 0, 1)).reshape(9, C, C).astype(op_dtype)
    w2_t = jnp.transpose(w2, (2, 3, 0, 1)).reshape(9, C, C).astype(op_dtype)
    b1_c = b1.reshape(C, 1).astype(jnp.float32)
    b2_c = b2.reshape(C, 1).astype(jnp.float32)

    # Precomputed per-tap validity masks over flattened spatial positions p = h*W + w.
    rows = jnp.arange(H)[:, None]
    cols = jnp.arange(W)[None, :]
    masks = []
    for kh in range(3):
        for kw in range(3):
            dh, dw = kh - 1, kw - 1
            ok = ((rows + dh >= 0) & (rows + dh < H) &
                  (cols + dw >= 0) & (cols + dw < W))            # (H, W)
            masks.append(ok.reshape(1, HW))
    mask_arr = jnp.stack(masks, axis=0).astype(jnp.float32)      # (9, 1, HW)

    kernel = functools.partial(_resnet_block_kernel, H=H, W=W, C=C, margin=margin, eps=eps)

    itemsize = jnp.dtype(op_dtype).itemsize
    # VMEM budget derived from actual block sizes (not a hardcoded 32 MiB):
    # double-buffered in/out activation blocks, constant-index weight/bias/mask blocks,
    # the f32 shift scratch, and an allowance for f32 intermediates (acc, h, taps, ...).
    block_bytes = (
        2 * 2 * C * HW * itemsize                 # x / out blocks (double-buffered)
        + 2 * 2 * 9 * C * C * itemsize            # conv weights
        + 2 * 2 * C * 4                           # biases
        + 2 * 9 * HW * 4                          # masks
        + C * (HW + 2 * margin) * 4               # shift scratch
        + 6 * C * HW * 4                          # f32 intermediates
    )
    vmem_limit = int(min(100 * 1024 * 1024,
                         max(32 * 1024 * 1024, int(block_bytes * 1.25))))

    cost = pl.CostEstimate(
        flops=4 * N * HW * 9 * C * C,             # two 3x3 convs: 2 * (2*M*K*N)
        transcendentals=2 * N * C,                # two rsqrt per channel per image
        bytes_accessed=(2 * N * C * HW * itemsize + 2 * 9 * C * C * itemsize
                        + 2 * C * 4 + 9 * HW * 4))

    out_flat = pl.pallas_call(
        kernel,
        out_shape=jax.ShapeDtypeStruct((N, C, HW), op_dtype),
        grid_spec=pltpu.PrefetchScalarGridSpec(
            num_scalar_prefetch=0,
            grid=(N,),
            in_specs=[
                pl.BlockSpec((1, C, HW), lambda n: (n, 0, 0)),    # x (per batch element)
                pl.BlockSpec((9, C, C), lambda n: (0, 0, 0)),     # conv1 weights (constant)
                pl.BlockSpec((C, 1), lambda n: (0, 0)),           # conv1 bias
                pl.BlockSpec((9, C, C), lambda n: (0, 0, 0)),     # conv2 weights (constant)
                pl.BlockSpec((C, 1), lambda n: (0, 0)),           # conv2 bias
                pl.BlockSpec((9, 1, HW), lambda n: (0, 0, 0)),    # tap masks (constant)
            ],
            out_specs=pl.BlockSpec((1, C, HW), lambda n: (n, 0, 0)),
            scratch_shapes=[pltpu.VMEM((C, HW + 2 * margin), jnp.float32)],
        ),
        compiler_params=pltpu.CompilerParams(
            dimension_semantics=("parallel",),
            vmem_limit_bytes=vmem_limit,
        ),
        cost_estimate=cost,
    )(x_flat, w1_t, b1_c, w2_t, b2_c, mask_arr)

    return out_flat.reshape(N, C, H, W)


def _reference_forward(x, w1, b1, w2, b2, eps=1e-5):
    """Plain-JAX reference matching the PyTorch ResnetBlock semantics."""
    def conv_in(h, w, b):
        y = jax.lax.conv_general_dilated(
            h.astype(jnp.float32), w.astype(jnp.float32),
            window_strides=(1, 1), padding=((1, 1), (1, 1)),
            dimension_numbers=("NCHW", "OIHW", "NCHW"),
            precision=jax.lax.Precision.HIGHEST)
        y = y + b.astype(jnp.float32)[None, :, None, None]
        mean = jnp.mean(y, axis=(2, 3), keepdims=True)
        var = jnp.mean((y - mean) ** 2, axis=(2, 3), keepdims=True)
        return (y - mean) * jax.lax.rsqrt(var + eps)

    h = jnp.maximum(conv_in(x.astype(jnp.float32), w1, b1), 0.0)
    return x.astype(jnp.float32) + conv_in(h, w2, b2)


if __name__ == "__main__":
    key = jax.random.PRNGKey(0)
    k_x, k_w1, k_b1, k_w2, k_b2 = jax.random.split(key, 5)

    N, dim, H, W = 2, 4, 16, 16
    x = jax.random.normal(k_x, (N, dim, H, W), dtype=jnp.float32)

    # Deterministic synthetic parameters (same shapes/init scale as nn.Conv2d(dim, dim, 3)).
    fan_in = dim * 3 * 3
    bound = 1.0 / (fan_in ** 0.5)
    w1 = jax.random.uniform(k_w1, (dim, dim, 3, 3), jnp.float32, -bound, bound)
    b1 = jax.random.uniform(k_b1, (dim,), jnp.float32, -bound, bound)
    w2 = jax.random.uniform(k_w2, (dim, dim, 3, 3), jnp.float32, -bound, bound)
    b2 = jax.random.uniform(k_b2, (dim,), jnp.float32, -bound, bound)

    out = resnet_block_forward(x, w1, b1, w2, b2)
    out = jax.block_until_ready(out)

    ref = _reference_forward(x, w1, b1, w2, b2)
    assert out.shape == (N, dim, H, W)
    max_err = float(jnp.max(jnp.abs(out - ref)))
    assert jnp.allclose(out, ref, atol=2e-3, rtol=2e-3), f"mismatch vs reference (max abs err {max_err})"

    print("KERNEL_OK")
</pallas_src>

<mosaic_0001>
module attributes {stable_mosaic.version = 11 : i64} {
  func.func @_resnet_block_kernel(%arg0: i32, %arg1: memref<1x4x256xf32, #tpu.memory_space<vmem>>, %arg2: memref<9x4x4xf32, #tpu.memory_space<vmem>>, %arg3: memref<4x1xf32, #tpu.memory_space<vmem>>, %arg4: memref<9x4x4xf32, #tpu.memory_space<vmem>>, %arg5: memref<4x1xf32, #tpu.memory_space<vmem>>, %arg6: memref<9x1x256xf32, #tpu.memory_space<vmem>>, %arg7: memref<1x4x256xf32, #tpu.memory_space<vmem>>, %arg8: memref<4x512xf32, #tpu.memory_space<vmem>>) attributes {dimension_semantics = [#tpu.dimension_semantics<parallel>], iteration_bounds = array<i64: 2>, scalar_prefetch = 0 : i64, scratch_operands = 1 : i64, tpu.core_type = #tpu.core_type<tc>, window_params = [{transform_indices = @transform_0, window_bounds = array<i64: 1, 4, 256>}, {pipeline_mode = #tpu.pipeline_mode<synchronous>, transform_indices = @transform_1, window_bounds = array<i64: 9, 4, 4>}, {pipeline_mode = #tpu.pipeline_mode<synchronous>, transform_indices = @transform_2, window_bounds = array<i64: 4, 1>}, {pipeline_mode = #tpu.pipeline_mode<synchronous>, transform_indices = @transform_3, window_bounds = array<i64: 9, 4, 4>}, {pipeline_mode = #tpu.pipeline_mode<synchronous>, transform_indices = @transform_4, window_bounds = array<i64: 4, 1>}, {pipeline_mode = #tpu.pipeline_mode<synchronous>, transform_indices = @transform_5, window_bounds = array<i64: 9, 1, 256>}, {transform_indices = @transform_6, window_bounds = array<i64: 1, 4, 256>}]} {
    %c0 = arith.constant 0 : index
    %c0_0 = arith.constant 0 : index
    %c0_1 = arith.constant 0 : index
    %0 = vector.load %arg6[%c0, %c0_0, %c0_1] : memref<9x1x256xf32, #tpu.memory_space<vmem>>, vector<1x1x256xf32>
    %1 = vector.shape_cast %0 : vector<1x1x256xf32> to vector<1x256xf32>
    %cst = arith.constant 0.000000e+00 : f32
    %2 = vector.broadcast %cst : f32 to vector<1x256xf32>
    %3 = arith.cmpf one, %1, %2 : vector<1x256xf32>
    %c1 = arith.constant 1 : index
    %c0_2 = arith.constant 0 : index
    %c0_3 = arith.constant 0 : index
    %4 = vector.load %arg6[%c1, %c0_2, %c0_3] : memref<9x1x256xf32, #tpu.memory_space<vmem>>, vector<1x1x256xf32>
    %5 = vector.shape_cast %4 : vector<1x1x256xf32> to vector<1x256xf32>
    %cst_4 = arith.constant 0.000000e+00 : f32
    %6 = vector.broadcast %cst_4 : f32 to vector<1x256xf32>
    %7 = arith.cmpf one, %5, %6 : vector<1x256xf32>
    %c2 = arith.constant 2 : index
    %c0_5 = arith.constant 0 : index
    %c0_6 = arith.constant 0 : index
    %8 = vector.load %arg6[%c2, %c0_5, %c0_6] : memref<9x1x256xf32, #tpu.memory_space<vmem>>, vector<1x1x256xf32>
    %9 = vector.shape_cast %8 : vector<1x1x256xf32> to vector<1x256xf32>
    %cst_7 = arith.constant 0.000000e+00 : f32
    %10 = vector.broadcast %cst_7 : f32 to vector<1x256xf32>
    %11 = arith.cmpf one, %9, %10 : vector<1x256xf32>
    %c3 = arith.constant 3 : index
    %c0_8 = arith.constant 0 : index
    %c0_9 = arith.constant 0 : index
    %12 = vector.load %arg6[%c3, %c0_8, %c0_9] : memref<9x1x256xf32, #tpu.memory_space<vmem>>, vector<1x1x256xf32>
    %13 = vector.shape_cast %12 : vector<1x1x256xf32> to vector<1x256xf32>
    %cst_10 = arith.constant 0.000000e+00 : f32
    %14 = vector.broadcast %cst_10 : f32 to vector<1x256xf32>
    %15 = arith.cmpf one, %13, %14 : vector<1x256xf32>
    %c4 = arith.constant 4 : index
    %c0_11 = arith.constant 0 : index
    %c0_12 = arith.constant 0 : index
    %16 = vector.load %arg6[%c4, %c0_11, %c0_12] : memref<9x1x256xf32, #tpu.memory_space<vmem>>, vector<1x1x256xf32>
    %17 = vector.shape_cast %16 : vector<1x1x256xf32> to vector<1x256xf32>
    %cst_13 = arith.constant 0.000000e+00 : f32
    %18 = vector.broadcast %cst_13 : f32 to vector<1x256xf32>
    %19 = arith.cmpf one, %17, %18 : vector<1x256xf32>
    %c5 = arith.constant 5 : index
    %c0_14 = arith.constant 0 : index
    %c0_15 = arith.constant 0 : index
    %20 = vector.load %arg6[%c5, %c0_14, %c0_15] : memref<9x1x256xf32, #tpu.memory_space<vmem>>, vector<1x1x256xf32>
    %21 = vector.shape_cast %20 : vector<1x1x256xf32> to vector<1x256xf32>
    %cst_16 = arith.constant 0.000000e+00 : f32
    %22 = vector.broadcast %cst_16 : f32 to vector<1x256xf32>
    %23 = arith.cmpf one, %21, %22 : vector<1x256xf32>
    %c6 = arith.constant 6 : index
    %c0_17 = arith.constant 0 : index
    %c0_18 = arith.constant 0 : index
    %24 = vector.load %arg6[%c6, %c0_17, %c0_18] : memref<9x1x256xf32, #tpu.memory_space<vmem>>, vector<1x1x256xf32>
    %25 = vector.shape_cast %24 : vector<1x1x256xf32> to vector<1x256xf32>
    %cst_19 = arith.constant 0.000000e+00 : f32
    %26 = vector.broadcast %cst_19 : f32 to vector<1x256xf32>
    %27 = arith.cmpf one, %25, %26 : vector<1x256xf32>
    %c7 = arith.constant 7 : index
    %c0_20 = arith.constant 0 : index
    %c0_21 = arith.constant 0 : index
    %28 = vector.load %arg6[%c7, %c0_20, %c0_21] : memref<9x1x256xf32, #tpu.memory_space<vmem>>, vector<1x1x256xf32>
    %29 = vector.shape_cast %28 : vector<1x1x256xf32> to vector<1x256xf32>
    %cst_22 = arith.constant 0.000000e+00 : f32
    %30 = vector.broadcast %cst_22 : f32 to vector<1x256xf32>
    %31 = arith.cmpf one, %29, %30 : vector<1x256xf32>
    %c8 = arith.constant 8 : index
    %c0_23 = arith.constant 0 : index
    %c0_24 = arith.constant 0 : index
    %32 = vector.load %arg6[%c8, %c0_23, %c0_24] : memref<9x1x256xf32, #tpu.memory_space<vmem>>, vector<1x1x256xf32>
    %33 = vector.shape_cast %32 : vector<1x1x256xf32> to vector<1x256xf32>
    %cst_25 = arith.constant 0.000000e+00 : f32
    %34 = vector.broadcast %cst_25 : f32 to vector<1x256xf32>
    %35 = arith.cmpf one, %33, %34 : vector<1x256xf32>
    %c0_26 = arith.constant 0 : index
    %c0_27 = arith.constant 0 : index
    %c0_28 = arith.constant 0 : index
    %36 = vector.load %arg1[%c0_26, %c0_27, %c0_28] : memref<1x4x256xf32, #tpu.memory_space<vmem>>, vector<1x4x256xf32>
    %37 = vector.shape_cast %36 : vector<1x4x256xf32> to vector<4x256xf32>
    %c0_29 = arith.constant 0 : index
    %c128 = arith.constant 128 : index
    %38 = vector.load %arg8[%c0_29, %c128] : memref<4x512xf32, #tpu.memory_space<vmem>>, vector<4x256xf32>
    tpu.vector_store %arg8[%c0_29, %c128], %37 {strides = array<i32>} : memref<4x512xf32, #tpu.memory_space<vmem>>, vector<4x256xf32>,
    %cst_30 = arith.constant 0.000000e+00 : f32
    %39 = vector.broadcast %cst_30 : f32 to vector<4x256xf32>
    %c0_31 = arith.constant 0 : index
    %c111 = arith.constant 111 : index
    %40 = vector.load %arg8[%c0_31, %c111] : memref<4x512xf32, #tpu.memory_space<vmem>>, vector<4x256xf32>
    %cst_32 = arith.constant 0.000000e+00 : f32
    %41 = vector.shape_cast %3 : vector<1x256xi1> to vector<1x256xi1>
    %42 = vector.broadcast %41 : vector<1x256xi1> to vector<4x256xi1>
    %43 = vector.broadcast %cst_32 : f32 to vector<4x256xf32>
    %44 = arith.select %42, %40, %43 : vector<4x256xi1>, vector<4x256xf32>
    %c0_33 = arith.constant 0 : index
    %c0_34 = arith.constant 0 : index
    %c0_35 = arith.constant 0 : index
    %45 = vector.load %arg2[%c0_33, %c0_34, %c0_35] : memref<9x4x4xf32, #tpu.memory_space<vmem>>, vector<1x4x4xf32>
    %46 = vector.shape_cast %45 : vector<1x4x4xf32> to vector<4x4xf32>
    %cst_36 = arith.constant dense<0.000000e+00> : vector<4x256xf32>
    %47 = tpu.matmul %46, %44, %cst_36 {dimension_numbers = #tpu.dot_dimension_numbers<[1], [0], [0], [1], [0, 0, 1, 1], [], []>} : vector<4x4xf32>, vector<4x256xf32>, vector<4x256xf32> -> vector<4x256xf32>
    %48 = arith.addf %39, %47 : vector<4x256xf32>
    %c0_37 = arith.constant 0 : index
    %c112 = arith.constant 112 : index
    %49 = vector.load %arg8[%c0_37, %c112] : memref<4x512xf32, #tpu.memory_space<vmem>>, vector<4x256xf32>
    %cst_38 = arith.constant 0.000000e+00 : f32
    %50 = vector.shape_cast %7 : vector<1x256xi1> to vector<1x256xi1>
    %51 = vector.broadcast %50 : vector<1x256xi1> to vector<4x256xi1>
    %52 = vector.broadcast %cst_38 : f32 to vector<4x256xf32>
    %53 = arith.select %51, %49, %52 : vector<4x256xi1>, vector<4x256xf32>
    %c1_39 = arith.constant 1 : index
    %c0_40 = arith.constant 0 : index
    %c0_41 = arith.constant 0 : index
    %54 = vector.load %arg2[%c1_39, %c0_40, %c0_41] : memref<9x4x4xf32, #tpu.memory_space<vmem>>, vector<1x4x4xf32>
    %55 = vector.shape_cast %54 : vector<1x4x4xf32> to vector<4x4xf32>
    %cst_42 = arith.constant dense<0.000000e+00> : vector<4x256xf32>
    %56 = tpu.matmul %55, %53, %cst_42 {dimension_numbers = #tpu.dot_dimension_numbers<[1], [0], [0], [1], [0, 0, 1, 1], [], []>} : vector<4x4xf32>, vector<4x256xf32>, vector<4x256xf32> -> vector<4x256xf32>
    %57 = arith.addf %48, %56 : vector<4x256xf32>
    %c0_43 = arith.constant 0 : index
    %c113 = arith.constant 113 : index
    %58 = vector.load %arg8[%c0_43, %c113] : memref<4x512xf32, #tpu.memory_space<vmem>>, vector<4x256xf32>
    %cst_44 = arith.constant 0.000000e+00 : f32
    %59 = vector.shape_cast %11 : vector<1x256xi1> to vector<1x256xi1>
    %60 = vector.broadcast %59 : vector<1x256xi1> to vector<4x256xi1>
    %61 = vector.broadcast %cst_44 : f32 to vector<4x256xf32>
    %62 = arith.select %60, %58, %61 : vector<4x256xi1>, vector<4x256xf32>
    %c2_45 = arith.constant 2 : index
    %c0_46 = arith.constant 0 : index
    %c0_47 = arith.constant 0 : index
    %63 = vector.load %arg2[%c2_45, %c0_46, %c0_47] : memref<9x4x4xf32, #tpu.memory_space<vmem>>, vector<1x4x4xf32>
    %64 = vector.shape_cast %63 : vector<1x4x4xf32> to vector<4x4xf32>
    %cst_48 = arith.constant dense<0.000000e+00> : vector<4x256xf32>
    %65 = tpu.matmul %64, %62, %cst_48 {dimension_numbers = #tpu.dot_dimension_numbers<[1], [0], [0], [1], [0, 0, 1, 1], [], []>} : vector<4x4xf32>, vector<4x256xf32>, vector<4x256xf32> -> vector<4x256xf32>
    %66 = arith.addf %57, %65 : vector<4x256xf32>
    %c0_49 = arith.constant 0 : index
    %c127 = arith.constant 127 : index
    %67 = vector.load %arg8[%c0_49, %c127] : memref<4x512xf32, #tpu.memory_space<vmem>>, vector<4x256xf32>
    %cst_50 = arith.constant 0.000000e+00 : f32
    %68 = vector.shape_cast %15 : vector<1x256xi1> to vector<1x256xi1>
    %69 = vector.broadcast %68 : vector<1x256xi1> to vector<4x256xi1>
    %70 = vector.broadcast %cst_50 : f32 to vector<4x256xf32>
    %71 = arith.select %69, %67, %70 : vector<4x256xi1>, vector<4x256xf32>
    %c3_51 = arith.constant 3 : index
    %c0_52 = arith.constant 0 : index
    %c0_53 = arith.constant 0 : index
    %72 = vector.load %arg2[%c3_51, %c0_52, %c0_53] : memref<9x4x4xf32, #tpu.memory_space<vmem>>, vector<1x4x4xf32>
    %73 = vector.shape_cast %72 : vector<1x4x4xf32> to vector<4x4xf32>
    %cst_54 = arith.constant dense<0.000000e+00> : vector<4x256xf32>
    %74 = tpu.matmul %73, %71, %cst_54 {dimension_numbers = #tpu.dot_dimension_numbers<[1], [0], [0], [1], [0, 0, 1, 1], [], []>} : vector<4x4xf32>, vector<4x256xf32>, vector<4x256xf32> -> vector<4x256xf32>
    %75 = arith.addf %66, %74 : vector<4x256xf32>
    %c0_55 = arith.constant 0 : index
    %c128_56 = arith.constant 128 : index
    %76 = vector.load %arg8[%c0_55, %c128_56] : memref<4x512xf32, #tpu.memory_space<vmem>>, vector<4x256xf32>
    %cst_57 = arith.constant 0.000000e+00 : f32
    %77 = vector.shape_cast %19 : vector<1x256xi1> to vector<1x256xi1>
    %78 = vector.broadcast %77 : vector<1x256xi1> to vector<4x256xi1>
    %79 = vector.broadcast %cst_57 : f32 to vector<4x256xf32>
    %80 = arith.select %78, %76, %79 : vector<4x256xi1>, vector<4x256xf32>
    %c4_58 = arith.constant 4 : index
    %c0_59 = arith.constant 0 : index
    %c0_60 = arith.constant 0 : index
    %81 = vector.load %arg2[%c4_58, %c0_59, %c0_60] : memref<9x4x4xf32, #tpu.memory_space<vmem>>, vector<1x4x4xf32>
    %82 = vector.shape_cast %81 : vector<1x4x4xf32> to vector<4x4xf32>
    %cst_61 = arith.constant dense<0.000000e+00> : vector<4x256xf32>
    %83 = tpu.matmul %82, %80, %cst_61 {dimension_numbers = #tpu.dot_dimension_numbers<[1], [0], [0], [1], [0, 0, 1, 1], [], []>} : vector<4x4xf32>, vector<4x256xf32>, vector<4x256xf32> -> vector<4x256xf32>
    %84 = arith.addf %75, %83 : vector<4x256xf32>
    %c0_62 = arith.constant 0 : index
    %c129 = arith.constant 129 : index
    %85 = vector.load %arg8[%c0_62, %c129] : memref<4x512xf32, #tpu.memory_space<vmem>>, vector<4x256xf32>
    %cst_63 = arith.constant 0.000000e+00 : f32
    %86 = vector.shape_cast %23 : vector<1x256xi1> to vector<1x256xi1>
    %87 = vector.broadcast %86 : vector<1x256xi1> to vector<4x256xi1>
    %88 = vector.broadcast %cst_63 : f32 to vector<4x256xf32>
    %89 = arith.select %87, %85, %88 : vector<4x256xi1>, vector<4x256xf32>
    %c5_64 = arith.constant 5 : index
    %c0_65 = arith.constant 0 : index
    %c0_66 = arith.constant 0 : index
    %90 = vector.load %arg2[%c5_64, %c0_65, %c0_66] : memref<9x4x4xf32, #tpu.memory_space<vmem>>, vector<1x4x4xf32>
    %91 = vector.shape_cast %90 : vector<1x4x4xf32> to vector<4x4xf32>
    %cst_67 = arith.constant dense<0.000000e+00> : vector<4x256xf32>
    %92 = tpu.matmul %91, %89, %cst_67 {dimension_numbers = #tpu.dot_dimension_numbers<[1], [0], [0], [1], [0, 0, 1, 1], [], []>} : vector<4x4xf32>, vector<4x256xf32>, vector<4x256xf32> -> vector<4x256xf32>
    %93 = arith.addf %84, %92 : vector<4x256xf32>
    %c0_68 = arith.constant 0 : index
    %c143 = arith.constant 143 : index
    %94 = vector.load %arg8[%c0_68, %c143] : memref<4x512xf32, #tpu.memory_space<vmem>>, vector<4x256xf32>
    %cst_69 = arith.constant 0.000000e+00 : f32
    %95 = vector.shape_cast %27 : vector<1x256xi1> to vector<1x256xi1>
    %96 = vector.broadcast %95 : vector<1x256xi1> to vector<4x256xi1>
    %97 = vector.broadcast %cst_69 : f32 to vector<4x256xf32>
    %98 = arith.select %96, %94, %97 : vector<4x256xi1>, vector<4x256xf32>
    %c6_70 = arith.constant 6 : index
    %c0_71 = arith.constant 0 : index
    %c0_72 = arith.constant 0 : index
    %99 = vector.load %arg2[%c6_70, %c0_71, %c0_72] : memref<9x4x4xf32, #tpu.memory_space<vmem>>, vector<1x4x4xf32>
    %100 = vector.shape_cast %99 : vector<1x4x4xf32> to vector<4x4xf32>
    %cst_73 = arith.constant dense<0.000000e+00> : vector<4x256xf32>
    %101 = tpu.matmul %100, %98, %cst_73 {dimension_numbers = #tpu.dot_dimension_numbers<[1], [0], [0], [1], [0, 0, 1, 1], [], []>} : vector<4x4xf32>, vector<4x256xf32>, vector<4x256xf32> -> vector<4x256xf32>
    %102 = arith.addf %93, %101 : vector<4x256xf32>
    %c0_74 = arith.constant 0 : index
    %c144 = arith.constant 144 : index
    %103 = vector.load %arg8[%c0_74, %c144] : memref<4x512xf32, #tpu.memory_space<vmem>>, vector<4x256xf32>
    %cst_75 = arith.constant 0.000000e+00 : f32
    %104 = vector.shape_cast %31 : vector<1x256xi1> to vector<1x256xi1>
    %105 = vector.broadcast %104 : vector<1x256xi1> to vector<4x256xi1>
    %106 = vector.broadcast %cst_75 : f32 to vector<4x256xf32>
    %107 = arith.select %105, %103, %106 : vector<4x256xi1>, vector<4x256xf32>
    %c7_76 = arith.constant 7 : index
    %c0_77 = arith.constant 0 : index
    %c0_78 = arith.constant 0 : index
    %108 = vector.load %arg2[%c7_76, %c0_77, %c0_78] : memref<9x4x4xf32, #tpu.memory_space<vmem>>, vector<1x4x4xf32>
    %109 = vector.shape_cast %108 : vector<1x4x4xf32> to vector<4x4xf32>
    %cst_79 = arith.constant dense<0.000000e+00> : vector<4x256xf32>
    %110 = tpu.matmul %109, %107, %cst_79 {dimension_numbers = #tpu.dot_dimension_numbers<[1], [0], [0], [1], [0, 0, 1, 1], [], []>} : vector<4x4xf32>, vector<4x256xf32>, vector<4x256xf32> -> vector<4x256xf32>
    %111 = arith.addf %102, %110 : vector<4x256xf32>
    %c0_80 = arith.constant 0 : index
    %c145 = arith.constant 145 : index
    %112 = vector.load %arg8[%c0_80, %c145] : memref<4x512xf32, #tpu.memory_space<vmem>>, vector<4x256xf32>
    %cst_81 = arith.constant 0.000000e+00 : f32
    %113 = vector.shape_cast %35 : vector<1x256xi1> to vector<1x256xi1>
    %114 = vector.broadcast %113 : vector<1x256xi1> to vector<4x256xi1>
    %115 = vector.broadcast %cst_81 : f32 to vector<4x256xf32>
    %116 = arith.select %114, %112, %115 : vector<4x256xi1>, vector<4x256xf32>
    %c8_82 = arith.constant 8 : index
    %c0_83 = arith.constant 0 : index
    %c0_84 = arith.constant 0 : index
    %117 = vector.load %arg2[%c8_82, %c0_83, %c0_84] : memref<9x4x4xf32, #tpu.memory_space<vmem>>, vector<1x4x4xf32>
    %118 = vector.shape_cast %117 : vector<1x4x4xf32> to vector<4x4xf32>
    %cst_85 = arith.constant dense<0.000000e+00> : vector<4x256xf32>
    %119 = tpu.matmul %118, %116, %cst_85 {dimension_numbers = #tpu.dot_dimension_numbers<[1], [0], [0], [1], [0, 0, 1, 1], [], []>} : vector<4x4xf32>, vector<4x256xf32>, vector<4x256xf32> -> vector<4x256xf32>
    %120 = arith.addf %111, %119 : vector<4x256xf32>
    %c0_86 = arith.constant 0 : index
    %c0_87 = arith.constant 0 : index
    %121 = vector.load %arg3[%c0_86, %c0_87] : memref<4x1xf32, #tpu.memory_space<vmem>>, vector<4x1xf32>
    %122 = vector.broadcast %121 : vector<4x1xf32> to vector<4x256xf32>
    %123 = arith.addf %120, %122 : vector<4x256xf32>
    %cst_88 = arith.constant dense<0.000000e+00> : vector<4xf32>
    %124 = vector.multi_reduction <add>, %123, %cst_88 [1] : vector<4x256xf32> to vector<4xf32>
    %125 = vector.shape_cast %124 : vector<4xf32> to vector<4x1xf32>
    %cst_89 = arith.constant 3.906250e-03 : f32
    %126 = vector.broadcast %cst_89 : f32 to vector<4x1xf32>
    %127 = arith.mulf %125, %126 : vector<4x1xf32>
    %128 = vector.broadcast %127 : vector<4x1xf32> to vector<4x256xf32>
    %129 = arith.subf %123, %128 : vector<4x256xf32>
    %130 = arith.mulf %129, %129 : vector<4x256xf32>
    %cst_90 = arith.constant dense<0.000000e+00> : vector<4xf32>
    %131 = vector.multi_reduction <add>, %130, %cst_90 [1] : vector<4x256xf32> to vector<4xf32>
    %132 = vector.shape_cast %131 : vector<4xf32> to vector<4x1xf32>
    %cst_91 = arith.constant 3.906250e-03 : f32
    %133 = vector.broadcast %cst_91 : f32 to vector<4x1xf32>
    %134 = arith.mulf %132, %133 : vector<4x1xf32>
    %cst_92 = arith.constant 9.99999974E-6 : f32
    %135 = vector.broadcast %cst_92 : f32 to vector<4x1xf32>
    %136 = arith.addf %134, %135 : vector<4x1xf32>
    %137 = math.rsqrt %136 : vector<4x1xf32>
    %138 = vector.broadcast %137 : vector<4x1xf32> to vector<4x256xf32>
    %139 = arith.mulf %129, %138 : vector<4x256xf32>
    %cst_93 = arith.constant 0.000000e+00 : f32
    %140 = vector.broadcast %cst_93 : f32 to vector<4x256xf32>
    %141 = arith.maximumf %139, %140 : vector<4x256xf32>
    %c0_94 = arith.constant 0 : index
    %c128_95 = arith.constant 128 : index
    %142 = vector.load %arg8[%c0_94, %c128_95] : memref<4x512xf32, #tpu.memory_space<vmem>>, vector<4x256xf32>
    tpu.vector_store %arg8[%c0_94, %c128_95], %141 {strides = array<i32>} : memref<4x512xf32, #tpu.memory_space<vmem>>, vector<4x256xf32>,
    %cst_96 = arith.constant 0.000000e+00 : f32
    %143 = vector.broadcast %cst_96 : f32 to vector<4x256xf32>
    %c0_97 = arith.constant 0 : index
    %c111_98 = arith.constant 111 : index
    %144 = vector.load %arg8[%c0_97, %c111_98] : memref<4x512xf32, #tpu.memory_space<vmem>>, vector<4x256xf32>
    %cst_99 = arith.constant 0.000000e+00 : f32
    %145 = vector.shape_cast %3 : vector<1x256xi1> to vector<1x256xi1>
    %146 = vector.broadcast %145 : vector<1x256xi1> to vector<4x256xi1>
    %147 = vector.broadcast %cst_99 : f32 to vector<4x256xf32>
    %148 = arith.select %146, %144, %147 : vector<4x256xi1>, vector<4x256xf32>
    %c0_100 = arith.constant 0 : index
    %c0_101 = arith.constant 0 : index
    %c0_102 = arith.constant 0 : index
    %149 = vector.load %arg4[%c0_100, %c0_101, %c0_102] : memref<9x4x4xf32, #tpu.memory_space<vmem>>, vector<1x4x4xf32>
    %150 = vector.shape_cast %149 : vector<1x4x4xf32> to vector<4x4xf32>
    %cst_103 = arith.constant dense<0.000000e+00> : vector<4x256xf32>
    %151 = tpu.matmul %150, %148, %cst_103 {dimension_numbers = #tpu.dot_dimension_numbers<[1], [0], [0], [1], [0, 0, 1, 1], [], []>} : vector<4x4xf32>, vector<4x256xf32>, vector<4x256xf32> -> vector<4x256xf32>
    %152 = arith.addf %143, %151 : vector<4x256xf32>
    %c0_104 = arith.constant 0 : index
    %c112_105 = arith.constant 112 : index
    %153 = vector.load %arg8[%c0_104, %c112_105] : memref<4x512xf32, #tpu.memory_space<vmem>>, vector<4x256xf32>
    %cst_106 = arith.constant 0.000000e+00 : f32
    %154 = vector.shape_cast %7 : vector<1x256xi1> to vector<1x256xi1>
    %155 = vector.broadcast %154 : vector<1x256xi1> to vector<4x256xi1>
    %156 = vector.broadcast %cst_106 : f32 to vector<4x256xf32>
    %157 = arith.select %155, %153, %156 : vector<4x256xi1>, vector<4x256xf32>
    %c1_107 = arith.constant 1 : index
    %c0_108 = arith.constant 0 : index
    %c0_109 = arith.constant 0 : index
    %158 = vector.load %arg4[%c1_107, %c0_108, %c0_109] : memref<9x4x4xf32, #tpu.memory_space<vmem>>, vector<1x4x4xf32>
    %159 = vector.shape_cast %158 : vector<1x4x4xf32> to vector<4x4xf32>
    %cst_110 = arith.constant dense<0.000000e+00> : vector<4x256xf32>
    %160 = tpu.matmul %159, %157, %cst_110 {dimension_numbers = #tpu.dot_dimension_numbers<[1], [0], [0], [1], [0, 0, 1, 1], [], []>} : vector<4x4xf32>, vector<4x256xf32>, vector<4x256xf32> -> vector<4x256xf32>
    %161 = arith.addf %152, %160 : vector<4x256xf32>
    %c0_111 = arith.constant 0 : index
    %c113_112 = arith.constant 113 : index
    %162 = vector.load %arg8[%c0_111, %c113_112] : memref<4x512xf32, #tpu.memory_space<vmem>>, vector<4x256xf32>
    %cst_113 = arith.constant 0.000000e+00 : f32
    %163 = vector.shape_cast %11 : vector<1x256xi1> to vector<1x256xi1>
    %164 = vector.broadcast %163 : vector<1x256xi1> to vector<4x256xi1>
    %165 = vector.broadcast %cst_113 : f32 to vector<4x256xf32>
    %166 = arith.select %164, %162, %165 : vector<4x256xi1>, vector<4x256xf32>
    %c2_114 = arith.constant 2 : index
    %c0_115 = arith.constant 0 : index
    %c0_116 = arith.constant 0 : index
    %167 = vector.load %arg4[%c2_114, %c0_115, %c0_116] : memref<9x4x4xf32, #tpu.memory_space<vmem>>, vector<1x4x4xf32>
    %168 = vector.shape_cast %167 : vector<1x4x4xf32> to vector<4x4xf32>
    %cst_117 = arith.constant dense<0.000000e+00> : vector<4x256xf32>
    %169 = tpu.matmul %168, %166, %cst_117 {dimension_numbers = #tpu.dot_dimension_numbers<[1], [0], [0], [1], [0, 0, 1, 1], [], []>} : vector<4x4xf32>, vector<4x256xf32>, vector<4x256xf32> -> vector<4x256xf32>
    %170 = arith.addf %161, %169 : vector<4x256xf32>
    %c0_118 = arith.constant 0 : index
    %c127_119 = arith.constant 127 : index
    %171 = vector.load %arg8[%c0_118, %c127_119] : memref<4x512xf32, #tpu.memory_space<vmem>>, vector<4x256xf32>
    %cst_120 = arith.constant 0.000000e+00 : f32
    %172 = vector.shape_cast %15 : vector<1x256xi1> to vector<1x256xi1>
    %173 = vector.broadcast %172 : vector<1x256xi1> to vector<4x256xi1>
    %174 = vector.broadcast %cst_120 : f32 to vector<4x256xf32>
    %175 = arith.select %173, %171, %174 : vector<4x256xi1>, vector<4x256xf32>
    %c3_121 = arith.constant 3 : index
    %c0_122 = arith.constant 0 : index
    %c0_123 = arith.constant 0 : index
    %176 = vector.load %arg4[%c3_121, %c0_122, %c0_123] : memref<9x4x4xf32, #tpu.memory_space<vmem>>, vector<1x4x4xf32>
    %177 = vector.shape_cast %176 : vector<1x4x4xf32> to vector<4x4xf32>
    %cst_124 = arith.constant dense<0.000000e+00> : vector<4x256xf32>
    %178 = tpu.matmul %177, %175, %cst_124 {dimension_numbers = #tpu.dot_dimension_numbers<[1], [0], [0], [1], [0, 0, 1, 1], [], []>} : vector<4x4xf32>, vector<4x256xf32>, vector<4x256xf32> -> vector<4x256xf32>
    %179 = arith.addf %170, %178 : vector<4x256xf32>
    %c0_125 = arith.constant 0 : index
    %c128_126 = arith.constant 128 : index
    %180 = vector.load %arg8[%c0_125, %c128_126] : memref<4x512xf32, #tpu.memory_space<vmem>>, vector<4x256xf32>
    %cst_127 = arith.constant 0.000000e+00 : f32
    %181 = vector.shape_cast %19 : vector<1x256xi1> to vector<1x256xi1>
    %182 = vector.broadcast %181 : vector<1x256xi1> to vector<4x256xi1>
    %183 = vector.broadcast %cst_127 : f32 to vector<4x256xf32>
    %184 = arith.select %182, %180, %183 : vector<4x256xi1>, vector<4x256xf32>
    %c4_128 = arith.constant 4 : index
    %c0_129 = arith.constant 0 : index
    %c0_130 = arith.constant 0 : index
    %185 = vector.load %arg4[%c4_128, %c0_129, %c0_130] : memref<9x4x4xf32, #tpu.memory_space<vmem>>, vector<1x4x4xf32>
    %186 = vector.shape_cast %185 : vector<1x4x4xf32> to vector<4x4xf32>
    %cst_131 = arith.constant dense<0.000000e+00> : vector<4x256xf32>
    %187 = tpu.matmul %186, %184, %cst_131 {dimension_numbers = #tpu.dot_dimension_numbers<[1], [0], [0], [1], [0, 0, 1, 1], [], []>} : vector<4x4xf32>, vector<4x256xf32>, vector<4x256xf32> -> vector<4x256xf32>
    %188 = arith.addf %179, %187 : vector<4x256xf32>
    %c0_132 = arith.constant 0 : index
    %c129_133 = arith.constant 129 : index
    %189 = vector.load %arg8[%c0_132, %c129_133] : memref<4x512xf32, #tpu.memory_space<vmem>>, vector<4x256xf32>
    %cst_134 = arith.constant 0.000000e+00 : f32
    %190 = vector.shape_cast %23 : vector<1x256xi1> to vector<1x256xi1>
    %191 = vector.broadcast %190 : vector<1x256xi1> to vector<4x256xi1>
    %192 = vector.broadcast %cst_134 : f32 to vector<4x256xf32>
    %193 = arith.select %191, %189, %192 : vector<4x256xi1>, vector<4x256xf32>
    %c5_135 = arith.constant 5 : index
    %c0_136 = arith.constant 0 : index
    %c0_137 = arith.constant 0 : index
    %194 = vector.load %arg4[%c5_135, %c0_136, %c0_137] : memref<9x4x4xf32, #tpu.memory_space<vmem>>, vector<1x4x4xf32>
    %195 = vector.shape_cast %194 : vector<1x4x4xf32> to vector<4x4xf32>
    %cst_138 = arith.constant dense<0.000000e+00> : vector<4x256xf32>
    %196 = tpu.matmul %195, %193, %cst_138 {dimension_numbers = #tpu.dot_dimension_numbers<[1], [0], [0], [1], [0, 0, 1, 1], [], []>} : vector<4x4xf32>, vector<4x256xf32>, vector<4x256xf32> -> vector<4x256xf32>
    %197 = arith.addf %188, %196 : vector<4x256xf32>
    %c0_139 = arith.constant 0 : index
    %c143_140 = arith.constant 143 : index
    %198 = vector.load %arg8[%c0_139, %c143_140] : memref<4x512xf32, #tpu.memory_space<vmem>>, vector<4x256xf32>
    %cst_141 = arith.constant 0.000000e+00 : f32
    %199 = vector.shape_cast %27 : vector<1x256xi1> to vector<1x256xi1>
    %200 = vector.broadcast %199 : vector<1x256xi1> to vector<4x256xi1>
    %201 = vector.broadcast %cst_141 : f32 to vector<4x256xf32>
    %202 = arith.select %200, %198, %201 : vector<4x256xi1>, vector<4x256xf32>
    %c6_142 = arith.constant 6 : index
    %c0_143 = arith.constant 0 : index
    %c0_144 = arith.constant 0 : index
    %203 = vector.load %arg4[%c6_142, %c0_143, %c0_144] : memref<9x4x4xf32, #tpu.memory_space<vmem>>, vector<1x4x4xf32>
    %204 = vector.shape_cast %203 : vector<1x4x4xf32> to vector<4x4xf32>
    %cst_145 = arith.constant dense<0.000000e+00> : vector<4x256xf32>
    %205 = tpu.matmul %204, %202, %cst_145 {dimension_numbers = #tpu.dot_dimension_numbers<[1], [0], [0], [1], [0, 0, 1, 1], [], []>} : vector<4x4xf32>, vector<4x256xf32>, vector<4x256xf32> -> vector<4x256xf32>
    %206 = arith.addf %197, %205 : vector<4x256xf32>
    %c0_146 = arith.constant 0 : index
    %c144_147 = arith.constant 144 : index
    %207 = vector.load %arg8[%c0_146, %c144_147] : memref<4x512xf32, #tpu.memory_space<vmem>>, vector<4x256xf32>
    %cst_148 = arith.constant 0.000000e+00 : f32
    %208 = vector.shape_cast %31 : vector<1x256xi1> to vector<1x256xi1>
    %209 = vector.broadcast %208 : vector<1x256xi1> to vector<4x256xi1>
    %210 = vector.broadcast %cst_148 : f32 to vector<4x256xf32>
    %211 = arith.select %209, %207, %210 : vector<4x256xi1>, vector<4x256xf32>
    %c7_149 = arith.constant 7 : index
    %c0_150 = arith.constant 0 : index
    %c0_151 = arith.constant 0 : index
    %212 = vector.load %arg4[%c7_149, %c0_150, %c0_151] : memref<9x4x4xf32, #tpu.memory_space<vmem>>, vector<1x4x4xf32>
    %213 = vector.shape_cast %212 : vector<1x4x4xf32> to vector<4x4xf32>
    %cst_152 = arith.constant dense<0.000000e+00> : vector<4x256xf32>
    %214 = tpu.matmul %213, %211, %cst_152 {dimension_numbers = #tpu.dot_dimension_numbers<[1], [0], [0], [1], [0, 0, 1, 1], [], []>} : vector<4x4xf32>, vector<4x256xf32>, vector<4x256xf32> -> vector<4x256xf32>
    %215 = arith.addf %206, %214 : vector<4x256xf32>
    %c0_153 = arith.constant 0 : index
    %c145_154 = arith.constant 145 : index
    %216 = vector.load %arg8[%c0_153, %c145_154] : memref<4x512xf32, #tpu.memory_space<vmem>>, vector<4x256xf32>
    %cst_155 = arith.constant 0.000000e+00 : f32
    %217 = vector.shape_cast %35 : vector<1x256xi1> to vector<1x256xi1>
    %218 = vector.broadcast %217 : vector<1x256xi1> to vector<4x256xi1>
    %219 = vector.broadcast %cst_155 : f32 to vector<4x256xf32>
    %220 = arith.select %218, %216, %219 : vector<4x256xi1>, vector<4x256xf32>
    %c8_156 = arith.constant 8 : index
    %c0_157 = arith.constant 0 : index
    %c0_158 = arith.constant 0 : index
    %221 = vector.load %arg4[%c8_156, %c0_157, %c0_158] : memref<9x4x4xf32, #tpu.memory_space<vmem>>, vector<1x4x4xf32>
    %222 = vector.shape_cast %221 : vector<1x4x4xf32> to vector<4x4xf32>
    %cst_159 = arith.constant dense<0.000000e+00> : vector<4x256xf32>
    %223 = tpu.matmul %222, %220, %cst_159 {dimension_numbers = #tpu.dot_dimension_numbers<[1], [0], [0], [1], [0, 0, 1, 1], [], []>} : vector<4x4xf32>, vector<4x256xf32>, vector<4x256xf32> -> vector<4x256xf32>
    %224 = arith.addf %215, %223 : vector<4x256xf32>
    %c0_160 = arith.constant 0 : index
    %c0_161 = arith.constant 0 : index
    %225 = vector.load %arg5[%c0_160, %c0_161] : memref<4x1xf32, #tpu.memory_space<vmem>>, vector<4x1xf32>
    %226 = vector.broadcast %225 : vector<4x1xf32> to vector<4x256xf32>
    %227 = arith.addf %224, %226 : vector<4x256xf32>
    %cst_162 = arith.constant dense<0.000000e+00> : vector<4xf32>
    %228 = vector.multi_reduction <add>, %227, %cst_162 [1] : vector<4x256xf32> to vector<4xf32>
    %229 = vector.shape_cast %228 : vector<4xf32> to vector<4x1xf32>
    %cst_163 = arith.constant 3.906250e-03 : f32
    %230 = vector.broadcast %cst_163 : f32 to vector<4x1xf32>
    %231 = arith.mulf %229, %230 : vector<4x1xf32>
    %232 = vector.broadcast %231 : vector<4x1xf32> to vector<4x256xf32>
    %233 = arith.subf %227, %232 : vector<4x256xf32>
    %234 = arith.mulf %233, %233 : vector<4x256xf32>
    %cst_164 = arith.constant dense<0.000000e+00> : vector<4xf32>
    %235 = vector.multi_reduction <add>, %234, %cst_164 [1] : vector<4x256xf32> to vector<4xf32>
    %236 = vector.shape_cast %235 : vector<4xf32> to vector<4x1xf32>
    %cst_165 = arith.constant 3.906250e-03 : f32
    %237 = vector.broadcast %cst_165 : f32 to vector<4x1xf32>
    %238 = arith.mulf %236, %237 : vector<4x1xf32>
    %cst_166 = arith.constant 9.99999974E-6 : f32
    %239 = vector.broadcast %cst_166 : f32 to vector<4x1xf32>
    %240 = arith.addf %238, %239 : vector<4x1xf32>
    %241 = math.rsqrt %240 : vector<4x1xf32>
    %242 = vector.broadcast %241 : vector<4x1xf32> to vector<4x256xf32>
    %243 = arith.mulf %233, %242 : vector<4x256xf32>
    %244 = arith.addf %37, %243 : vector<4x256xf32>
    %c0_167 = arith.constant 0 : index
    %c0_168 = arith.constant 0 : index
    %c0_169 = arith.constant 0 : index
    %245 = vector.load %arg7[%c0_167, %c0_168, %c0_169] : memref<1x4x256xf32, #tpu.memory_space<vmem>>, vector<1x4x256xf32>
    %246 = vector.shape_cast %245 : vector<1x4x256xf32> to vector<4x256xf32>
    %247 = vector.shape_cast %244 : vector<4x256xf32> to vector<1x4x256xf32>
    tpu.vector_store %arg7[%c0_167, %c0_168, %c0_169], %247 {strides = array<i32>} : memref<1x4x256xf32, #tpu.memory_space<vmem>>, vector<1x4x256xf32>,
    return
  }
  func.func @transform_0(%arg0: i32) -> (i32, i32, i32) {
    %c0_i32 = arith.constant 0 : i32
    %c0_i32_0 = arith.constant 0 : i32
    %c0_i32_1 = arith.constant 0 : i32
    return %arg0, %c0_i32, %c0_i32_0 : i32, i32, i32
  }
  func.func @transform_1(%arg0: i32) -> (i32, i32, i32) {
    %c0_i32 = arith.constant 0 : i32
    %c0_i32_0 = arith.constant 0 : i32
    %c0_i32_1 = arith.constant 0 : i32
    %c0_i32_2 = arith.constant 0 : i32
    return %c0_i32, %c0_i32_0, %c0_i32_1 : i32, i32, i32
  }
  func.func @transform_2(%arg0: i32) -> (i32, i32) {
    %c0_i32 = arith.constant 0 : i32
    %c0_i32_0 = arith.constant 0 : i32
    %c0_i32_1 = arith.constant 0 : i32
    return %c0_i32, %c0_i32_0 : i32, i32
  }
  func.func @transform_3(%arg0: i32) -> (i32, i32, i32) {
    %c0_i32 = arith.constant 0 : i32
    %c0_i32_0 = arith.constant 0 : i32
    %c0_i32_1 = arith.constant 0 : i32
    %c0_i32_2 = arith.constant 0 : i32
    return %c0_i32, %c0_i32_0, %c0_i32_1 : i32, i32, i32
  }
  func.func @transform_4(%arg0: i32) -> (i32, i32) {
    %c0_i32 = arith.constant 0 : i32
    %c0_i32_0 = arith.constant 0 : i32
    %c0_i32_1 = arith.constant 0 : i32
    return %c0_i32, %c0_i32_0 : i32, i32
  }
  func.func @transform_5(%arg0: i32) -> (i32, i32, i32) {
    %c0_i32 = arith.constant 0 : i32
    %c0_i32_0 = arith.constant 0 : i32
    %c0_i32_1 = arith.constant 0 : i32
    %c0_i32_2 = arith.constant 0 : i32
    return %c0_i32, %c0_i32_0, %c0_i32_1 : i32, i32, i32
  }
  func.func @transform_6(%arg0: i32) -> (i32, i32, i32) {
    %c0_i32 = arith.constant 0 : i32
    %c0_i32_0 = arith.constant 0 : i32
    %c0_i32_1 = arith.constant 0 : i32
    return %arg0, %c0_i32, %c0_i32_0 : i32, i32, i32
  }
}

</mosaic_0001>

<llo_original>
// kernel: tpu_custom_call.1
$region0: #{tpu_custom_call.1}
  #allocation0 [shape = 'u32[]', space=smem, size = 0x4, offset = 0x4, fixed_abs, tag = 'smem constant byte address 0x4 - core index']
  #allocation1 [shape = 'u32[72,128]{1,0:T(1,128)}', space=vmem, size = 0x9000, scoped, tag = 'internal scratch']
  #allocation2 [shape = 'f32[4,512]{1,0:T(4,128)}', space=vmem, size = 0x2000, scoped, tag = 'scratch operand']
  %s0 = inlined_call_operand.vmem [shape: f32[2,4,256], index: 0, kind: input, shape index: {}]
  %s1 = inlined_call_operand.vmem [shape: f32[9,4,4], index: 1, kind: input, shape index: {}]
  %s2 = inlined_call_operand.vmem [shape: f32[4,1], index: 2, kind: input, shape index: {}]
  %s3 = inlined_call_operand.vmem [shape: f32[9,4,4], index: 3, kind: input, shape index: {}]
  %s4 = inlined_call_operand.vmem [shape: f32[4,1], index: 4, kind: input, shape index: {}]
  %s5 = inlined_call_operand.vmem [shape: f32[9,1,256], index: 5, kind: input, shape index: {}]
  %s6 = inlined_call_operand.hbm [shape: f32[2,4,256], index: 6, kind: output, shape index: {}]
  %s7 = sld [smem:[#allocation0]]
  $region57: #{tpu_custom_call.1} parent=0
    _
  %s9 = ssub.s32 1, %s7
  %s10 = scalar_select 0, %s9, %s7
  $region1: #{tpu_custom_call.1} parent=0
    #allocation3 [shape = 'u8[8192]{0}', space=vmem, size = 0x2000, scoped, tag = 'output window, operand 0']
    #allocation4 [shape = 's32[2]{0}', space=sflag, size = 0x8, scoped, tag = 'scoped memory for tpu_custom_call.1']
    %11 = vsyncpa [#allocation4], 0
    %s12 = scalar_lea.sflag [#allocation4], 1
    %13 = vsyncpa %s12, 0
    loop: start=0, step=1, limit=4
    $region2: #{tpu_custom_call.1} parent=1 // loop_pre_header
      _
    $region3: #{tpu_custom_call.1} parent=1 // loop_header
      %s15 = sphi 0, %s19
      %p16 = scmp.ge.s32.totalorder %s15, 4
      %s25 = sphi 0, %s27
      %s28 = sphi 0, %s25
      %s29 = sphi 0, %s28
      %s45 = sphi 0, %s29
      %s49 = sphi 0, %s49
      %s51 = sphi 0, %s49
      %s52 = sphi 0, %s51
      %s66 = sphi 0, %s52
      %s70 = sphi 0, %s70
      %s72 = sphi 0, %s70
      %s73 = sphi 0, %s72
      %s87 = sphi 0, %s73
      %s91 = sphi 0, %s91
      %s93 = sphi 0, %s91
      %s94 = sphi 0, %s93
      %s108 = sphi 0, %s94
      %s112 = sphi 0, %s112
      %s114 = sphi 0, %s112
      %s115 = sphi 0, %s114
      %s129 = sphi 0, %s115
      %s133 = sphi 0, %s133
      %s135 = sphi 0, %s133
      %s136 = sphi 0, %s135
      %s150 = sphi 0, %s136
      %s156 = sphi 0, %s158
      %s159 = sphi 0, %s156
      %s160 = sphi 0, %s159
      %s176 = sphi 0, %s160
    $region4: #{tpu_custom_call.1} parent=1 // loop_header_branch
      %18 = sbr.rel (%p16) target = $region8
    $region5: #{tpu_custom_call.1} parent=1 // loop_body
      %s20 = ssub.s32 %s15, 1
      %s21 = ssub.s32 %s15, 2
      %s22 = sadd.s32 %s15, 1
      %s23 = ssub.s32 %s15, %s22
      %p24 = scmp.eq.s32.totalorder %s23, 0
      %s26 = sadd.s32 %s25, 1
      %s27 = scalar_select %p24, %s25, %s26
      %p30 = pneg %p24
      %p31 = scmp.eq.s32.totalorder %s15, 1
      %p32 = por %p30, %p31
      %p33 = scmp.ne.s32.totalorder %s25, %s28
      %p34 = scmp.eq.s32.totalorder %s15, 0
      %p35 = por %p33, %p34
      %p36 = scmp.ne.s32.totalorder %s25, %s28
      %p37 = scmp.eq.s32.totalorder %s20, 1
      %p38 = por %p36, %p37
      %p39 = scmp.ne.s32.totalorder %s28, %s29
      %p40 = scmp.eq.s32.totalorder %s20, 0
      %p41 = por %p39, %p40
      %p42 = scmp.ne.s32.totalorder %s28, %s29
      %p43 = scmp.eq.s32.totalorder %s21, 1
      %p44 = por %p42, %p43
      %p46 = scmp.ne.s32.totalorder %s29, %s45
      %p47 = scmp.eq.s32.totalorder %s21, 0
      %p48 = por %p46, %p47
      %s50 = sadd.s32 %s49, 1
      %p53 = scmp.eq.s32.totalorder %s15, 1
      %p54 = scmp.ne.s32.totalorder %s49, %s51
      %p55 = scmp.eq.s32.totalorder %s15, 0
      %p56 = por %p54, %p55
      %p57 = scmp.ne.s32.totalorder %s49, %s51
      %p58 = scmp.eq.s32.totalorder %s20, 1
      %p59 = por %p57, %p58
      %p60 = scmp.ne.s32.totalorder %s51, %s52
      %p61 = scmp.eq.s32.totalorder %s20, 0
      %p62 = por %p60, %p61
      %p63 = scmp.ne.s32.totalorder %s51, %s52
      %p64 = scmp.eq.s32.totalorder %s21, 1
      %p65 = por %p63, %p64
      %p67 = scmp.ne.s32.totalorder %s52, %s66
      %p68 = scmp.eq.s32.totalorder %s21, 0
      %p69 = por %p67, %p68
      %s71 = sadd.s32 %s70, 1
      %p74 = scmp.eq.s32.totalorder %s15, 1
      %p75 = scmp.ne.s32.totalorder %s70, %s72
      %p76 = scmp.eq.s32.totalorder %s15, 0
      %p77 = por %p75, %p76
      %p78 = scmp.ne.s32.totalorder %s70, %s72
      %p79 = scmp.eq.s32.totalorder %s20, 1
      %p80 = por %p78, %p79
      %p81 = scmp.ne.s32.totalorder %s72, %s73
      %p82 = scmp.eq.s32.totalorder %s20, 0
      %p83 = por %p81, %p82
      %p84 = scmp.ne.s32.totalorder %s72, %s73
      %p85 = scmp.eq.s32.totalorder %s21, 1
      %p86 = por %p84, %p85
      %p88 = scmp.ne.s32.totalorder %s73, %s87
      %p89 = scmp.eq.s32.totalorder %s21, 0
      %p90 = por %p88, %p89
      %s92 = sadd.s32 %s91, 1
      %p95 = scmp.eq.s32.totalorder %s15, 1
      %p96 = scmp.ne.s32.totalorder %s91, %s93
      %p97 = scmp.eq.s32.totalorder %s15, 0
      %p98 = por %p96, %p97
      %p99 = scmp.ne.s32.totalorder %s91, %s93
      %p100 = scmp.eq.s32.totalorder %s20, 1
      %p101 = por %p99, %p100
      %p102 = scmp.ne.s32.totalorder %s93, %s94
      %p103 = scmp.eq.s32.totalorder %s20, 0
      %p104 = por %p102, %p103
      %p105 = scmp.ne.s32.totalorder %s93, %s94
      %p106 = scmp.eq.s32.totalorder %s21, 1
      %p107 = por %p105, %p106
      %p109 = scmp.ne.s32.totalorder %s94, %s108
      %p110 = scmp.eq.s32.totalorder %s21, 0
      %p111 = por %p109, %p110
      %s113 = sadd.s32 %s112, 1
      %p116 = scmp.eq.s32.totalorder %s15, 1
      %p117 = scmp.ne.s32.totalorder %s112, %s114
      %p118 = scmp.eq.s32.totalorder %s15, 0
      %p119 = por %p117, %p118
      %p120 = scmp.ne.s32.totalorder %s112, %s114
      %p121 = scmp.eq.s32.totalorder %s20, 1
      %p122 = por %p120, %p121
      %p123 = scmp.ne.s32.totalorder %s114, %s115
      %p124 = scmp.eq.s32.totalorder %s20, 0
      %p125 = por %p123, %p124
      %p126 = scmp.ne.s32.totalorder %s114, %s115
      %p127 = scmp.eq.s32.totalorder %s21, 1
      %p128 = por %p126, %p127
      %p130 = scmp.ne.s32.totalorder %s115, %s129
      %p131 = scmp.eq.s32.totalorder %s21, 0
      %p132 = por %p130, %p131
      %s134 = sadd.s32 %s133, 1
      %p137 = scmp.eq.s32.totalorder %s15, 1
      %p138 = scmp.ne.s32.totalorder %s133, %s135
      %p139 = scmp.eq.s32.totalorder %s15, 0
      %p140 = por %p138, %p139
      %p141 = scmp.ne.s32.totalorder %s133, %s135
      %p142 = scmp.eq.s32.totalorder %s20, 1
      %p143 = por %p141, %p142
      %p144 = scmp.ne.s32.totalorder %s135, %s136
      %p145 = scmp.eq.s32.totalorder %s20, 0
      %p146 = por %p144, %p145
      %p147 = scmp.ne.s32.totalorder %s135, %s136
      %p148 = scmp.eq.s32.totalorder %s21, 1
      %p149 = por %p147, %p148
      %p151 = scmp.ne.s32.totalorder %s136, %s150
      %p152 = scmp.eq.s32.totalorder %s21, 0
      %p153 = por %p151, %p152
      %s154 = ssub.s32 %s15, %s22
      %p155 = scmp.eq.s32.totalorder %s154, 0
      %s157 = sadd.s32 %s156, 1
      %s158 = scalar_select %p155, %s156, %s157
      %p161 = pneg %p155
      %p162 = scmp.eq.s32.totalorder %s15, 1
      %p163 = por %p161, %p162
      %p164 = scmp.ne.s32.totalorder %s156, %s159
      %p165 = scmp.eq.s32.totalorder %s15, 0
      %p166 = por %p164, %p165
      %p167 = scmp.ne.s32.totalorder %s156, %s159
      %p168 = scmp.eq.s32.totalorder %s20, 1
      %p169 = por %p167, %p168
      %p170 = scmp.ne.s32.totalorder %s159, %s160
      %p171 = scmp.eq.s32.totalorder %s20, 0
      %p172 = por %p170, %p171
      %p173 = scmp.ne.s32.totalorder %s159, %s160
      %p174 = scmp.eq.s32.totalorder %s21, 1
      %p175 = por %p173, %p174
      %p177 = scmp.ne.s32.totalorder %s160, %s176
      %p178 = scmp.eq.s32.totalorder %s21, 0
      %p179 = por %p177, %p178
      %p180 = scmp.le.s32.totalorder 1, %s15
      %p181 = scmp.lt.s32.totalorder %s15, 3
      %p182 = pnand %p180, %p181
      %p183 = pneg %p182
      // Predicated region
      $region9: #{tpu_custom_call.1} parent=5 // pred_check
        _
      $region10: #{tpu_custom_call.1} parent=5 // pred_check_branch
        %185 = sbr.rel (%p182) target = $region12
      $region11: #{tpu_custom_call.1} parent=5 // pred_region
        %s186 = ssub.s32 %s15, 1
        // Predicated region
        $region13: #{tpu_custom_call.1} parent=11 // pred_check
          %p187 = pneg %p62
        $region14: #{tpu_custom_call.1} parent=11 // pred_check_branch
          %189 = sbr.rel (%p187) target = $region16
        $region15: #{tpu_custom_call.1} parent=11 // pred_region
          _
        $region16: #{tpu_custom_call.1} parent=11 // pred_fallthru
          _
        // Predicated region
        $region17: #{tpu_custom_call.1} parent=11 // pred_check
          %p190 = pneg %p83
        $region18: #{tpu_custom_call.1} parent=11 // pred_check_branch
          %192 = sbr.rel (%p190) target = $region20
        $region19: #{tpu_custom_call.1} parent=11 // pred_region
          _
        $region20: #{tpu_custom_call.1} parent=11 // pred_fallthru
          _
        // Predicated region
        $region21: #{tpu_custom_call.1} parent=11 // pred_check
          %p193 = pneg %p104
        $region22: #{tpu_custom_call.1} parent=11 // pred_check_branch
          %195 = sbr.rel (%p193) target = $region24
        $region23: #{tpu_custom_call.1} parent=11 // pred_region
          _
        $region24: #{tpu_custom_call.1} parent=11 // pred_fallthru
          _
        // Predicated region
        $region25: #{tpu_custom_call.1} parent=11 // pred_check
          %p196 = pneg %p125
        $region26: #{tpu_custom_call.1} parent=11 // pred_check_branch
          %198 = sbr.rel (%p196) target = $region28
        $region27: #{tpu_custom_call.1} parent=11 // pred_region
          _
        $region28: #{tpu_custom_call.1} parent=11 // pred_fallthru
          _
        // Predicated region
        $region29: #{tpu_custom_call.1} parent=11 // pred_check
          %p199 = pneg %p146
        $region30: #{tpu_custom_call.1} parent=11 // pred_check_branch
          %201 = sbr.rel (%p199) target = $region32
        $region31: #{tpu_custom_call.1} parent=11 // pred_region
          _
        $region32: #{tpu_custom_call.1} parent=11 // pred_fallthru
          _
      $region12: #{tpu_custom_call.1} parent=5 // pred_fallthru
        _
      %p202 = scmp.lt.s32.totalorder %s15, 2
      // Predicated region
      $region33: #{tpu_custom_call.1} parent=5 // pred_check
        %p203 = pneg %p202
      $region34: #{tpu_custom_call.1} parent=5 // pred_check_branch
        %205 = sbr.rel (%p203) target = $region36
      $region35: #{tpu_custom_call.1} parent=5 // pred_region
        // Predicated region
        $region37: #{tpu_custom_call.1} parent=35 // pred_check
          %p206 = pneg %p35
        $region38: #{tpu_custom_call.1} parent=35 // pred_check_branch
          %208 = sbr.rel (%p206) target = $region40
        $region39: #{tpu_custom_call.1} parent=35 // pred_region
          %p209 = scmp.lt.s32.totalorder %s15, 1
          %s210 = scalar_select %p209, %s15, 1
          %s211 = smul.addr %s210, 2
          %s212 = smul.addr %s211, 4
          %s213 = scalar_lea.vmem %s0, %s212
        $region40: #{tpu_custom_call.1} parent=35 // pred_fallthru
          _
      $region36: #{tpu_custom_call.1} parent=5 // pred_fallthru
        _
      %p214 = scmp.le.s32.totalorder 1, %s15
      %p215 = scmp.lt.s32.totalorder %s15, 3
      %p216 = pnand %p214, %p215
      %p217 = pneg %p216
      // Predicated region
      $region41: #{tpu_custom_call.1} parent=5 // pred_check
        _
      $region42: #{tpu_custom_call.1} parent=5 // pred_check_branch
        %219 = sbr.rel (%p216) target = $region44
      $region43: #{tpu_custom_call.1} parent=5 // pred_region
        %s220 = ssub.s32 %s15, 1
        %p221 = scmp.lt.s32.totalorder %s20, 1
        %s222 = scalar_select %p221, %s20, 1
        %s223 = smul.addr %s222, 2
        %s224 = smul.addr %s223, 4
        %s225 = scalar_lea.vmem %s0, %s224
        %p226 = pneg %p41
        %p227 = pneg %p38
        %p228 = pneg %p62
        %p229 = pneg %p59
        %p230 = pneg %p83
        %p231 = pneg %p80
        %p232 = pneg %p104
        %p233 = pneg %p101
        %p234 = pneg %p125
        %p235 = pneg %p122
        %p236 = pneg %p146
        %p237 = pneg %p143
        %p238 = pneg %p172
        %p239 = pneg %p169
        %s240 = sand.u32 %s159, 1
        %s241 = scalar_lea.sflag [#allocation4], %s240
        %s242 = sand.u32 %s159, 1
        %s243 = smul.addr %s242, 8
        %s244 = scalar_lea.vmem [#allocation3], %s243
        %p245 = scmp.lt.s32.totalorder %s20, 1
        %s246 = scalar_select %p245, %s20, 1
        %s247 = smul.addr %s246, 2
        %s248 = smul.addr %s247, 4
        %s249 = scalar_lea.vmem %s0, %s248
        %v250 = vld [vmem:[%s5] sm:$0x3]
        %vm251 = vcmp.ne.f32.partialorder %v250, 0.0
        %s252 = scalar_lea.vmem %s5, 2
        %v253 = vld [vmem:[%s252] sm:$0x3]
        %vm254 = vcmp.ne.f32.partialorder %v253, 0.0
        %s255 = scalar_lea.vmem %s5, 4
        %v256 = vld [vmem:[%s255] sm:$0x3]
        %vm257 = vcmp.ne.f32.partialorder %v256, 0.0
        %s258 = scalar_lea.vmem %s5, 6
        %v259 = vld [vmem:[%s258] sm:$0x3]
        %vm260 = vcmp.ne.f32.partialorder %v259, 0.0
        %s261 = scalar_lea.vmem %s5, 8
        %v262 = vld [vmem:[%s261] sm:$0x3]
        %vm263 = vcmp.ne.f32.partialorder %v262, 0.0
        %s264 = scalar_lea.vmem %s5, 10
        %v265 = vld [vmem:[%s264] sm:$0x3]
        %vm266 = vcmp.ne.f32.partialorder %v265, 0.0
        %s267 = scalar_lea.vmem %s5, 12
        %v268 = vld [vmem:[%s267] sm:$0x3]
        %vm269 = vcmp.ne.f32.partialorder %v268, 0.0
        %s270 = scalar_lea.vmem %s5, 14
        %v271 = vld [vmem:[%s270] sm:$0x3]
        %vm272 = vcmp.ne.f32.partialorder %v271, 0.0
        %s273 = scalar_lea.vmem %s5, 16
        %v274 = vld [vmem:[%s273] sm:$0x3]
        %vm275 = vcmp.ne.f32.partialorder %v274, 0.0
        %v276 = vld [vmem:[%s249] sm:$0xff]
        %277 = vst [vmem:[#allocation2 + $0x4] sm:$0xff] %v276
        %v278 = vld [vmem:[#allocation2] sm:$0xff]
        %v279 = vld [vmem:[#allocation2 + $0x8] sm:$0xf]
        %v280 = vsel %vm251, 1, 0
        %v281 = vperm.slane %v280, 0
        %v282 = vperm.slane %v280, 1
        %vm283 = vcmp.eq.s32.totalorder %v281, 1
        %vm284 = vcmp.eq.s32.totalorder %v282, 1
        %287 = vst [vmem:[#allocation1] ss:$2 sm:$0xff] %v278
        %s288 = scalar_lea.vmem [#allocation1], 16
        %289 = vst [vmem:[%s288] ss:$2 sm:$0xff] %v279
        %v290 = vld.sshfl [vmem:[#allocation1] sm:$0xff pattern:$0x75316420]
        %v291 = vld.sshfl [vmem:[#allocation1 + $0x8] sm:$0xff pattern:$0x75316420]
        %v292 = vld.sshfl [vmem:[#allocation1 + $0x10] sm:$0xff pattern:$0x75316420]
        %293 = vrot.lane.b32.xlu0 %v290, 17
        %v294 = vpop.permute.xlu0 %293
        %295 = vrot.lane.b32.xlu0 %v291, 17
        %v296 = vpop.permute.xlu0 %295
        %297 = vrot.lane.b32.xlu0 %v292, 17
        %v298 = vpop.permute.xlu0 %297
        %vm299 = vcmask 138240
        %v300 = vsel %vm299, %v294, %v296
        %v301 = vsel %vm299, %v296, %v298
        %v304 = vsel %vm283, %v300, 0.0
        %v305 = vsel %vm284, %v301, 0.0
        %v306 = vld [vmem:[%s1] sm:$0xf]
        %v307 = vld [vmem:[#allocation2] sm:$0xff]
        %v308 = vld [vmem:[#allocation2 + $0x8] sm:$0xf]
        %v309 = vsel %vm254, 1, 0
        %v310 = vperm.slane %v309, 0
        %v311 = vperm.slane %v309, 1
        %vm312 = vcmp.eq.s32.totalorder %v310, 1
        %vm313 = vcmp.eq.s32.totalorder %v311, 1
        %316 = vst [vmem:[#allocation1] ss:$2 sm:$0xff] %v307
        %s317 = scalar_lea.vmem [#allocation1], 16
        %318 = vst [vmem:[%s317] ss:$2 sm:$0xff] %v308
        %v319 = vld.sshfl [vmem:[#allocation1] sm:$0xff pattern:$0x75316420]
        %v320 = vld.sshfl [vmem:[#allocation1 + $0x8] sm:$0xff pattern:$0x75316420]
        %v321 = vld.sshfl [vmem:[#allocation1 + $0x10] sm:$0xff pattern:$0x75316420]
        %322 = vrot.lane.b32.xlu0 %v319, 16
        %v323 = vpop.permute.xlu0 %322
        %324 = vrot.lane.b32.xlu0 %v320, 16
        %v325 = vpop.permute.xlu0 %324
        %326 = vrot.lane.b32.xlu0 %v321, 16
        %v327 = vpop.permute.xlu0 %326
        %vm328 = vcmask 130048
        %v329 = vsel %vm328, %v323, %v325
        %v330 = vsel %vm328, %v325, %v327
        %v333 = vsel %vm312, %v329, 0.0
        %v334 = vsel %vm313, %v330, 0.0
        %s335 = scalar_lea.vmem %s1, 4
        %v336 = vld [vmem:[%s335] sm:$0xf]
        %vm337 = vcmask 31744
        %v339 = vsel %vm337, %v336, 0
        %vm341 = vcmask 1043456
        %v343 = vsel %vm341, %v333, 0
        %v346 = vsel %vm341, %v334, 0
        %348 = vmatpush.msra.mxu0 0.0
        %349 = vmatpush.msra.mxu0 0.0
        %350 = vmatpush.msra.mxu0 0.0
        %351 = vmatpush.msra.mxu0 0.0
        %352 = vmatpush.msra.mxu0 0.0
        %353 = vmatpush.msra.mxu0 0.0
        %354 = vmatpush.msra.mxu0 0.0
        %355 = vmatpush.msra.mxu0 0.0
        %356 = vmatpush.msra.mxu0 0.0
        %357 = vmatpush.msra.mxu0 0.0
        %358 = vmatpush.msra.mxu0 0.0
        %359 = vmatpush.msra.mxu0 0.0
        %360 = vmatpush.msra.mxu0 0.0
        %361 = vmatpush.msra.mxu0 0.0
        %362 = vmatpush.msra.mxu0 0.0
        %363 = vmatpush.msra.mxu0 %v343
        %364 = vmatmul.f32.gmra.mxu0 %v339
        %v365 = vpop.f32.mrf.mxu0
        %v366 = vadd.f32 0.0, %v365
        %367 = vdwg.mxu0
        %368 = vmatpush.msra.mxu0 0.0
        %369 = vmatpush.msra.mxu0 0.0
        %370 = vmatpush.msra.mxu0 0.0
        %371 = vmatpush.msra.mxu0 0.0
        %372 = vmatpush.msra.mxu0 0.0
        %373 = vmatpush.msra.mxu0 0.0
        %374 = vmatpush.msra.mxu0 0.0
        %375 = vmatpush.msra.mxu0 0.0
        %376 = vmatpush.msra.mxu0 0.0
        %377 = vmatpush.msra.mxu0 0.0
        %378 = vmatpush.msra.mxu0 0.0
        %379 = vmatpush.msra.mxu0 0.0
        %380 = vmatpush.msra.mxu0 0.0
        %381 = vmatpush.msra.mxu0 0.0
        %382 = vmatpush.msra.mxu0 0.0
        %383 = vmatpush.msra.mxu0 %v346
        %384 = vmatmul.f32.gmra.mxu0 %v339
        %v385 = vpop.f32.mrf.mxu0
        %v386 = vadd.f32 0.0, %v385
        %387 = vdwg.mxu0
        %v389 = vsel %vm337, %v306, 0
        %v392 = vsel %vm341, %v304, 0
        %v395 = vsel %vm341, %v305, 0
        %397 = vmatpush.msra.mxu0 0.0
        %398 = vmatpush.msra.mxu0 0.0
        %399 = vmatpush.msra.mxu0 0.0
        %400 = vmatpush.msra.mxu0 0.0
        %401 = vmatpush.msra.mxu0 0.0
        %402 = vmatpush.msra.mxu0 0.0
        %403 = vmatpush.msra.mxu0 0.0
        %404 = vmatpush.msra.mxu0 0.0
        %405 = vmatpush.msra.mxu0 0.0
        %406 = vmatpush.msra.mxu0 0.0
        %407 = vmatpush.msra.mxu0 0.0
        %408 = vmatpush.msra.mxu0 0.0
        %409 = vmatpush.msra.mxu0 0.0
        %410 = vmatpush.msra.mxu0 0.0
        %411 = vmatpush.msra.mxu0 0.0
        %412 = vmatpush.msra.mxu0 %v392
        %413 = vmatmul.f32.gmra.mxu0 %v389
        %v414 = vpop.f32.mrf.mxu0
        %v415 = vadd.f32 %v366, %v414
        %416 = vdwg.mxu0
        %417 = vmatpush.msra.mxu0 0.0
        %418 = vmatpush.msra.mxu0 0.0
        %419 = vmatpush.msra.mxu0 0.0
        %420 = vmatpush.msra.mxu0 0.0
        %421 = vmatpush.msra.mxu0 0.0
        %422 = vmatpush.msra.mxu0 0.0
        %423 = vmatpush.msra.mxu0 0.0
        %424 = vmatpush.msra.mxu0 0.0
        %425 = vmatpush.msra.mxu0 0.0
        %426 = vmatpush.msra.mxu0 0.0
        %427 = vmatpush.msra.mxu0 0.0
        %428 = vmatpush.msra.mxu0 0.0
        %429 = vmatpush.msra.mxu0 0.0
        %430 = vmatpush.msra.mxu0 0.0
        %431 = vmatpush.msra.mxu0 0.0
        %432 = vmatpush.msra.mxu0 %v395
        %433 = vmatmul.f32.gmra.mxu0 %v389
        %v434 = vpop.f32.mrf.mxu0
        %v435 = vadd.f32 %v386, %v434
        %436 = vdwg.mxu0
        %v437 = vld [vmem:[#allocation2] sm:$0xff]
        %v438 = vld [vmem:[#allocation2 + $0x8] sm:$0xf]
        %v439 = vsel %vm257, 1, 0
        %v440 = vperm.slane %v439, 0
        %v441 = vperm.slane %v439, 1
        %vm442 = vcmp.eq.s32.totalorder %v440, 1
        %vm443 = vcmp.eq.s32.totalorder %v441, 1
        %446 = vst [vmem:[#allocation1] ss:$2 sm:$0xff] %v437
        %s447 = scalar_lea.vmem [#allocation1], 16
        %448 = vst [vmem:[%s447] ss:$2 sm:$0xff] %v438
        %v449 = vld.sshfl [vmem:[#allocation1] sm:$0xff pattern:$0x75316420]
        %v450 = vld.sshfl [vmem:[#allocation1 + $0x8] sm:$0xff pattern:$0x75316420]
        %v451 = vld.sshfl [vmem:[#allocation1 + $0x10] sm:$0xff pattern:$0x75316420]
        %452 = vrot.lane.b32.xlu0 %v449, 15
        %v453 = vpop.permute.xlu0 %452
        %454 = vrot.lane.b32.xlu0 %v450, 15
        %v455 = vpop.permute.xlu0 %454
        %456 = vrot.lane.b32.xlu0 %v451, 15
        %v457 = vpop.permute.xlu0 %456
        %vm458 = vcmask 121856
        %v459 = vsel %vm458, %v453, %v455
        %v460 = vsel %vm458, %v455, %v457
        %v463 = vsel %vm442, %v459, 0.0
        %v464 = vsel %vm443, %v460, 0.0
        %s465 = scalar_lea.vmem %s1, 8
        %v466 = vld [vmem:[%s465] sm:$0xf]
        %v468 = vsel %vm337, %v466, 0
        %v471 = vsel %vm341, %v463, 0
        %v474 = vsel %vm341, %v464, 0
        %476 = vmatpush.msra.mxu0 0.0
        %477 = vmatpush.msra.mxu0 0.0
        %478 = vmatpush.msra.mxu0 0.0
        %479 = vmatpush.msra.mxu0 0.0
        %480 = vmatpush.msra.mxu0 0.0
        %481 = vmatpush.msra.mxu0 0.0
        %482 = vmatpush.msra.mxu0 0.0
        %483 = vmatpush.msra.mxu0 0.0
        %484 = vmatpush.msra.mxu0 0.0
        %485 = vmatpush.msra.mxu0 0.0
        %486 = vmatpush.msra.mxu0 0.0
        %487 = vmatpush.msra.mxu0 0.0
        %488 = vmatpush.msra.mxu0 0.0
        %489 = vmatpush.msra.mxu0 0.0
        %490 = vmatpush.msra.mxu0 0.0
        %491 = vmatpush.msra.mxu0 %v471
        %492 = vmatmul.f32.gmra.mxu0 %v468
        %v493 = vpop.f32.mrf.mxu0
        %v494 = vadd.f32 0.0, %v493
        %495 = vdwg.mxu0
        %496 = vmatpush.msra.mxu0 0.0
        %497 = vmatpush.msra.mxu0 0.0
        %498 = vmatpush.msra.mxu0 0.0
        %499 = vmatpush.msra.mxu0 0.0
        %500 = vmatpush.msra.mxu0 0.0
        %501 = vmatpush.msra.mxu0 0.0
        %502 = vmatpush.msra.mxu0 0.0
        %503 = vmatpush.msra.mxu0 0.0
        %504 = vmatpush.msra.mxu0 0.0
        %505 = vmatpush.msra.mxu0 0.0
        %506 = vmatpush.msra.mxu0 0.0
        %507 = vmatpush.msra.mxu0 0.0
        %508 = vmatpush.msra.mxu0 0.0
        %509 = vmatpush.msra.mxu0 0.0
        %510 = vmatpush.msra.mxu0 0.0
        %511 = vmatpush.msra.mxu0 %v474
        %512 = vmatmul.f32.gmra.mxu0 %v468
        %v513 = vpop.f32.mrf.mxu0
        %v514 = vadd.f32 0.0, %v513
        %515 = vdwg.mxu0
        %v516 = vadd.f32 %v415, %v494
        %v517 = vadd.f32 %v435, %v514
        %v518 = vld [vmem:[#allocation2] sm:$0xff]
        %v519 = vld [vmem:[#allocation2 + $0x8] sm:$0xf]
        %v520 = vsel %vm260, 1, 0
        %v521 = vperm.slane %v520, 0
        %v522 = vperm.slane %v520, 1
        %vm523 = vcmp.eq.s32.totalorder %v521, 1
        %vm524 = vcmp.eq.s32.totalorder %v522, 1
        %527 = vst [vmem:[#allocation1] ss:$2 sm:$0xff] %v518
        %s528 = scalar_lea.vmem [#allocation1], 16
        %529 = vst [vmem:[%s528] ss:$2 sm:$0xff] %v519
        %v530 = vld.sshfl [vmem:[#allocation1] sm:$0xff pattern:$0x75316420]
        %v531 = vld.sshfl [vmem:[#allocation1 + $0x8] sm:$0xff pattern:$0x75316420]
        %v532 = vld.sshfl [vmem:[#allocation1 + $0x10] sm:$0xff pattern:$0x75316420]
        %533 = vrot.lane.b32.xlu0 %v530, 1
        %v534 = vpop.permute.xlu0 %533
        %535 = vrot.lane.b32.xlu0 %v531, 1
        %v536 = vpop.permute.xlu0 %535
        %537 = vrot.lane.b32.xlu0 %v532, 1
        %v538 = vpop.permute.xlu0 %537
        %vm539 = vcmask 7168
        %v540 = vsel %vm539, %v534, %v536
        %v541 = vsel %vm539, %v536, %v538
        %v544 = vsel %vm523, %v540, 0.0
        %v545 = vsel %vm524, %v541, 0.0
        %s546 = scalar_lea.vmem %s1, 12
        %v547 = vld [vmem:[%s546] sm:$0xf]
        %v549 = vsel %vm337, %v547, 0
        %v552 = vsel %vm341, %v544, 0
        %v555 = vsel %vm341, %v545, 0
        %557 = vmatpush.msra.mxu0 0.0
        %558 = vmatpush.msra.mxu0 0.0
        %559 = vmatpush.msra.mxu0 0.0
        %560 = vmatpush.msra.mxu0 0.0
        %561 = vmatpush.msra.mxu0 0.0
        %562 = vmatpush.msra.mxu0 0.0
        %563 = vmatpush.msra.mxu0 0.0
        %564 = vmatpush.msra.mxu0 0.0
        %565 = vmatpush.msra.mxu0 0.0
        %566 = vmatpush.msra.mxu0 0.0
        %567 = vmatpush.msra.mxu0 0.0
        %568 = vmatpush.msra.mxu0 0.0
        %569 = vmatpush.msra.mxu0 0.0
        %570 = vmatpush.msra.mxu0 0.0
        %571 = vmatpush.msra.mxu0 0.0
        %572 = vmatpush.msra.mxu0 %v552
        %573 = vmatmul.f32.gmra.mxu0 %v549
        %v574 = vpop.f32.mrf.mxu0
        %v575 = vadd.f32 0.0, %v574
        %576 = vdwg.mxu0
        %577 = vmatpush.msra.mxu0 0.0
        %578 = vmatpush.msra.mxu0 0.0
        %579 = vmatpush.msra.mxu0 0.0
        %580 = vmatpush.msra.mxu0 0.0
        %581 = vmatpush.msra.mxu0 0.0
        %582 = vmatpush.msra.mxu0 0.0
        %583 = vmatpush.msra.mxu0 0.0
        %584 = vmatpush.msra.mxu0 0.0
        %585 = vmatpush.msra.mxu0 0.0
        %586 = vmatpush.msra.mxu0 0.0
        %587 = vmatpush.msra.mxu0 0.0
        %588 = vmatpush.msra.mxu0 0.0
        %589 = vmatpush.msra.mxu0 0.0
        %590 = vmatpush.msra.mxu0 0.0
        %591 = vmatpush.msra.mxu0 0.0
        %592 = vmatpush.msra.mxu0 %v555
        %593 = vmatmul.f32.gmra.mxu0 %v549
        %v594 = vpop.f32.mrf.mxu0
        %v595 = vadd.f32 0.0, %v594
        %596 = vdwg.mxu0
        %v597 = vadd.f32 %v516, %v575
        %v598 = vadd.f32 %v517, %v595
        %v599 = vld [vmem:[#allocation2 + $0x4] sm:$0xff]
        %v600 = vsel %vm263, 1, 0
        %v601 = vperm.slane %v600, 0
        %v602 = vperm.slane %v600, 1
        %vm603 = vcmp.eq.s32.totalorder %v601, 1
        %vm604 = vcmp.eq.s32.totalorder %v602, 1
        %606 = vst [vmem:[#allocation1] ss:$2 sm:$0xff] %v599
        %v607 = vld.sshfl [vmem:[#allocation1] sm:$0xff pattern:$0x75316420]
        %v608 = vld.sshfl [vmem:[#allocation1 + $0x8] sm:$0xff pattern:$0x75316420]
        %v611 = vsel %vm603, %v607, 0.0
        %v612 = vsel %vm604, %v608, 0.0
        %s613 = scalar_lea.vmem %s1, 16
        %v614 = vld [vmem:[%s613] sm:$0xf]
        %v616 = vsel %vm337, %v614, 0
        %v619 = vsel %vm341, %v611, 0
        %v622 = vsel %vm341, %v612, 0
        %624 = vmatpush.msra.mxu0 0.0
        %625 = vmatpush.msra.mxu0 0.0
        %626 = vmatpush.msra.mxu0 0.0
        %627 = vmatpush.msra.mxu0 0.0
        %628 = vmatpush.msra.mxu0 0.0
        %629 = vmatpush.msra.mxu0 0.0
        %630 = vmatpush.msra.mxu0 0.0
        %631 = vmatpush.msra.mxu0 0.0
        %632 = vmatpush.msra.mxu0 0.0
        %633 = vmatpush.msra.mxu0 0.0
        %634 = vmatpush.msra.mxu0 0.0
        %635 = vmatpush.msra.mxu0 0.0
        %636 = vmatpush.msra.mxu0 0.0
        %637 = vmatpush.msra.mxu0 0.0
        %638 = vmatpush.msra.mxu0 0.0
        %639 = vmatpush.msra.mxu0 %v619
        %640 = vmatmul.f32.gmra.mxu0 %v616
        %v641 = vpop.f32.mrf.mxu0
        %v642 = vadd.f32 0.0, %v641
        %643 = vdwg.mxu0
        %644 = vmatpush.msra.mxu0 0.0
        %645 = vmatpush.msra.mxu0 0.0
        %646 = vmatpush.msra.mxu0 0.0
        %647 = vmatpush.msra.mxu0 0.0
        %648 = vmatpush.msra.mxu0 0.0
        %649 = vmatpush.msra.mxu0 0.0
        %650 = vmatpush.msra.mxu0 0.0
        %651 = vmatpush.msra.mxu0 0.0
        %652 = vmatpush.msra.mxu0 0.0
        %653 = vmatpush.msra.mxu0 0.0
        %654 = vmatpush.msra.mxu0 0.0
        %655 = vmatpush.msra.mxu0 0.0
        %656 = vmatpush.msra.mxu0 0.0
        %657 = vmatpush.msra.mxu0 0.0
        %658 = vmatpush.msra.mxu0 0.0
        %659 = vmatpush.msra.mxu0 %v622
        %660 = vmatmul.f32.gmra.mxu0 %v616
        %v661 = vpop.f32.mrf.mxu0
        %v662 = vadd.f32 0.0, %v661
        %663 = vdwg.mxu0
        %v664 = vadd.f32 %v597, %v642
        %v665 = vadd.f32 %v598, %v662
        %v666 = vld [vmem:[#allocation2 + $0x4] sm:$0xff]
        %v667 = vld [vmem:[#allocation2 + $0xc] sm:$0xf]
        %v668 = vsel %vm266, 1, 0
        %v669 = vperm.slane %v668, 0
        %v670 = vperm.slane %v668, 1
        %vm671 = vcmp.eq.s32.totalorder %v669, 1
        %vm672 = vcmp.eq.s32.totalorder %v670, 1
        %675 = vst [vmem:[#allocation1] ss:$2 sm:$0xff] %v666
        %s676 = scalar_lea.vmem [#allocation1], 16
        %677 = vst [vmem:[%s676] ss:$2 sm:$0xff] %v667
        %v678 = vld.sshfl [vmem:[#allocation1] sm:$0xff pattern:$0x75316420]
        %v679 = vld.sshfl [vmem:[#allocation1 + $0x8] sm:$0xff pattern:$0x75316420]
        %v680 = vld.sshfl [vmem:[#allocation1 + $0x10] sm:$0xff pattern:$0x75316420]
        %681 = vrot.lane.b32.xlu0 %v678, 127
        %v682 = vpop.permute.xlu0 %681
        %683 = vrot.lane.b32.xlu0 %v679, 127
        %v684 = vpop.permute.xlu0 %683
        %685 = vrot.lane.b32.xlu0 %v680, 127
        %v686 = vpop.permute.xlu0 %685
        %vm687 = vcmask 1039360
        %v688 = vsel %vm687, %v682, %v684
        %v689 = vsel %vm687, %v684, %v686
        %v692 = vsel %vm671, %v688, 0.0
        %v693 = vsel %vm672, %v689, 0.0
        %s694 = scalar_lea.vmem %s1, 20
        %v695 = vld [vmem:[%s694] sm:$0xf]
        %v697 = vsel %vm337, %v695, 0
        %v700 = vsel %vm341, %v692, 0
        %v703 = vsel %vm341, %v693, 0
        %705 = vmatpush.msra.mxu0 0.0
        %706 = vmatpush.msra.mxu0 0.0
        %707 = vmatpush.msra.mxu0 0.0
        %708 = vmatpush.msra.mxu0 0.0
        %709 = vmatpush.msra.mxu0 0.0
        %710 = vmatpush.msra.mxu0 0.0
        %711 = vmatpush.msra.mxu0 0.0
        %712 = vmatpush.msra.mxu0 0.0
        %713 = vmatpush.msra.mxu0 0.0
        %714 = vmatpush.msra.mxu0 0.0
        %715 = vmatpush.msra.mxu0 0.0
        %716 = vmatpush.msra.mxu0 0.0
        %717 = vmatpush.msra.mxu0 0.0
        %718 = vmatpush.msra.mxu0 0.0
        %719 = vmatpush.msra.mxu0 0.0
        %720 = vmatpush.msra.mxu0 %v700
        %721 = vmatmul.f32.gmra.mxu0 %v697
        %v722 = vpop.f32.mrf.mxu0
        %v723 = vadd.f32 0.0, %v722
        %724 = vdwg.mxu0
        %725 = vmatpush.msra.mxu0 0.0
        %726 = vmatpush.msra.mxu0 0.0
        %727 = vmatpush.msra.mxu0 0.0
        %728 = vmatpush.msra.mxu0 0.0
        %729 = vmatpush.msra.mxu0 0.0
        %730 = vmatpush.msra.mxu0 0.0
        %731 = vmatpush.msra.mxu0 0.0
        %732 = vmatpush.msra.mxu0 0.0
        %733 = vmatpush.msra.mxu0 0.0
        %734 = vmatpush.msra.mxu0 0.0
        %735 = vmatpush.msra.mxu0 0.0
        %736 = vmatpush.msra.mxu0 0.0
        %737 = vmatpush.msra.mxu0 0.0
        %738 = vmatpush.msra.mxu0 0.0
        %739 = vmatpush.msra.mxu0 0.0
        %740 = vmatpush.msra.mxu0 %v703
        %741 = vmatmul.f32.gmra.mxu0 %v697
        %v742 = vpop.f32.mrf.mxu0
        %v743 = vadd.f32 0.0, %v742
        %744 = vdwg.mxu0
        %v745 = vadd.f32 %v664, %v723
        %v746 = vadd.f32 %v665, %v743
        %v747 = vld [vmem:[#allocation2 + $0x4] sm:$0xff]
        %v748 = vld [vmem:[#allocation2 + $0xc] sm:$0xf]
        %v749 = vsel %vm269, 1, 0
        %v750 = vperm.slane %v749, 0
        %v751 = vperm.slane %v749, 1
        %vm752 = vcmp.eq.s32.totalorder %v750, 1
        %vm753 = vcmp.eq.s32.totalorder %v751, 1
        %756 = vst [vmem:[#allocation1] ss:$2 sm:$0xff] %v747
        %s757 = scalar_lea.vmem [#allocation1], 16
        %758 = vst [vmem:[%s757] ss:$2 sm:$0xff] %v748
        %v759 = vld.sshfl [vmem:[#allocation1] sm:$0xff pattern:$0x75316420]
        %v760 = vld.sshfl [vmem:[#allocation1 + $0x8] sm:$0xff pattern:$0x75316420]
        %v761 = vld.sshfl [vmem:[#allocation1 + $0x10] sm:$0xff pattern:$0x75316420]
        %762 = vrot.lane.b32.xlu0 %v759, 113
        %v763 = vpop.permute.xlu0 %762
        %764 = vrot.lane.b32.xlu0 %v760, 113
        %v765 = vpop.permute.xlu0 %764
        %766 = vrot.lane.b32.xlu0 %v761, 113
        %v767 = vpop.permute.xlu0 %766
        %vm768 = vcmask 924672
        %v769 = vsel %vm768, %v763, %v765
        %v770 = vsel %vm768, %v765, %v767
        %v773 = vsel %vm752, %v769, 0.0
        %v774 = vsel %vm753, %v770, 0.0
        %s775 = scalar_lea.vmem %s1, 24
        %v776 = vld [vmem:[%s775] sm:$0xf]
        %v778 = vsel %vm337, %v776, 0
        %v781 = vsel %vm341, %v773, 0
        %v784 = vsel %vm341, %v774, 0
        %786 = vmatpush.msra.mxu0 0.0
        %787 = vmatpush.msra.mxu0 0.0
        %788 = vmatpush.msra.mxu0 0.0
        %789 = vmatpush.msra.mxu0 0.0
        %790 = vmatpush.msra.mxu0 0.0
        %791 = vmatpush.msra.mxu0 0.0
        %792 = vmatpush.msra.mxu0 0.0
        %793 = vmatpush.msra.mxu0 0.0
        %794 = vmatpush.msra.mxu0 0.0
        %795 = vmatpush.msra.mxu0 0.0
        %796 = vmatpush.msra.mxu0 0.0
        %797 = vmatpush.msra.mxu0 0.0
        %798 = vmatpush.msra.mxu0 0.0
        %799 = vmatpush.msra.mxu0 0.0
        %800 = vmatpush.msra.mxu0 0.0
        %801 = vmatpush.msra.mxu0 %v781
        %802 = vmatmul.f32.gmra.mxu0 %v778
        %v803 = vpop.f32.mrf.mxu0
        %v804 = vadd.f32 0.0, %v803
        %805 = vdwg.mxu0
        %806 = vmatpush.msra.mxu0 0.0
        %807 = vmatpush.msra.mxu0 0.0
        %808 = vmatpush.msra.mxu0 0.0
        %809 = vmatpush.msra.mxu0 0.0
        %810 = vmatpush.msra.mxu0 0.0
        %811 = vmatpush.msra.mxu0 0.0
        %812 = vmatpush.msra.mxu0 0.0
        %813 = vmatpush.msra.mxu0 0.0
        %814 = vmatpush.msra.mxu0 0.0
        %815 = vmatpush.msra.mxu0 0.0
        %816 = vmatpush.msra.mxu0 0.0
        %817 = vmatpush.msra.mxu0 0.0
        %818 = vmatpush.msra.mxu0 0.0
        %819 = vmatpush.msra.mxu0 0.0
        %820 = vmatpush.msra.mxu0 0.0
        %821 = vmatpush.msra.mxu0 %v784
        %822 = vmatmul.f32.gmra.mxu0 %v778
        %v823 = vpop.f32.mrf.mxu0
        %v824 = vadd.f32 0.0, %v823
        %825 = vdwg.mxu0
        %v826 = vadd.f32 %v745, %v804
        %v827 = vadd.f32 %v746, %v824
        %v828 = vld [vmem:[#allocation2 + $0x4] sm:$0xff]
        %v829 = vld [vmem:[#allocation2 + $0xc] sm:$0xf]
        %v830 = vsel %vm272, 1, 0
        %v831 = vperm.slane %v830, 0
        %v832 = vperm.slane %v830, 1
        %vm833 = vcmp.eq.s32.totalorder %v831, 1
        %vm834 = vcmp.eq.s32.totalorder %v832, 1
        %837 = vst [vmem:[#allocation1] ss:$2 sm:$0xff] %v828
        %s838 = scalar_lea.vmem [#allocation1], 16
        %839 = vst [vmem:[%s838] ss:$2 sm:$0xff] %v829
        %v840 = vld.sshfl [vmem:[#allocation1] sm:$0xff pattern:$0x75316420]
        %v841 = vld.sshfl [vmem:[#allocation1 + $0x8] sm:$0xff pattern:$0x75316420]
        %v842 = vld.sshfl [vmem:[#allocation1 + $0x10] sm:$0xff pattern:$0x75316420]
        %843 = vrot.lane.b32.xlu0 %v840, 112
        %v844 = vpop.permute.xlu0 %843
        %845 = vrot.lane.b32.xlu0 %v841, 112
        %v846 = vpop.permute.xlu0 %845
        %847 = vrot.lane.b32.xlu0 %v842, 112
        %v848 = vpop.permute.xlu0 %847
        %vm849 = vcmask 916480
        %v850 = vsel %vm849, %v844, %v846
        %v851 = vsel %vm849, %v846, %v848
        %v854 = vsel %vm833, %v850, 0.0
        %v855 = vsel %vm834, %v851, 0.0
        %s856 = scalar_lea.vmem %s1, 28
        %v857 = vld [vmem:[%s856] sm:$0xf]
        %v859 = vsel %vm337, %v857, 0
        %v862 = vsel %vm341, %v854, 0
        %v865 = vsel %vm341, %v855, 0
        %867 = vmatpush.msra.mxu0 0.0
        %868 = vmatpush.msra.mxu0 0.0
        %869 = vmatpush.msra.mxu0 0.0
        %870 = vmatpush.msra.mxu0 0.0
        %871 = vmatpush.msra.mxu0 0.0
        %872 = vmatpush.msra.mxu0 0.0
        %873 = vmatpush.msra.mxu0 0.0
        %874 = vmatpush.msra.mxu0 0.0
        %875 = vmatpush.msra.mxu0 0.0
        %876 = vmatpush.msra.mxu0 0.0
        %877 = vmatpush.msra.mxu0 0.0
        %878 = vmatpush.msra.mxu0 0.0
        %879 = vmatpush.msra.mxu0 0.0
        %880 = vmatpush.msra.mxu0 0.0
        %881 = vmatpush.msra.mxu0 0.0
        %882 = vmatpush.msra.mxu0 %v862
        %883 = vmatmul.f32.gmra.mxu0 %v859
        %v884 = vpop.f32.mrf.mxu0
        %v885 = vadd.f32 0.0, %v884
        %886 = vdwg.mxu0
        %887 = vmatpush.msra.mxu0 0.0
        %888 = vmatpush.msra.mxu0 0.0
        %889 = vmatpush.msra.mxu0 0.0
        %890 = vmatpush.msra.mxu0 0.0
        %891 = vmatpush.msra.mxu0 0.0
        %892 = vmatpush.msra.mxu0 0.0
        %893 = vmatpush.msra.mxu0 0.0
        %894 = vmatpush.msra.mxu0 0.0
        %895 = vmatpush.msra.mxu0 0.0
        %896 = vmatpush.msra.mxu0 0.0
        %897 = vmatpush.msra.mxu0 0.0
        %898 = vmatpush.msra.mxu0 0.0
        %899 = vmatpush.msra.mxu0 0.0
        %900 = vmatpush.msra.mxu0 0.0
        %901 = vmatpush.msra.mxu0 0.0
        %902 = vmatpush.msra.mxu0 %v865
        %903 = vmatmul.f32.gmra.mxu0 %v859
        %v904 = vpop.f32.mrf.mxu0
        %v905 = vadd.f32 0.0, %v904
        %906 = vdwg.mxu0
        %v907 = vadd.f32 %v826, %v885
        %v908 = vadd.f32 %v827, %v905
        %v909 = vld [vmem:[#allocation2 + $0x4] sm:$0xff]
        %v910 = vld [vmem:[#allocation2 + $0xc] sm:$0xf]
        %v911 = vsel %vm275, 1, 0
        %v912 = vperm.slane %v911, 0
        %v913 = vperm.slane %v911, 1
        %vm914 = vcmp.eq.s32.totalorder %v912, 1
        %vm915 = vcmp.eq.s32.totalorder %v913, 1
        %918 = vst [vmem:[#allocation1] ss:$2 sm:$0xff] %v909
        %s919 = scalar_lea.vmem [#allocation1], 16
        %920 = vst [vmem:[%s919] ss:$2 sm:$0xff] %v910
        %v921 = vld.sshfl [vmem:[#allocation1] sm:$0xff pattern:$0x75316420]
        %v922 = vld.sshfl [vmem:[#allocation1 + $0x8] sm:$0xff pattern:$0x75316420]
        %v923 = vld.sshfl [vmem:[#allocation1 + $0x10] sm:$0xff pattern:$0x75316420]
        %924 = vrot.lane.b32.xlu0 %v921, 111
        %v925 = vpop.permute.xlu0 %924
        %926 = vrot.lane.b32.xlu0 %v922, 111
        %v927 = vpop.permute.xlu0 %926
        %928 = vrot.lane.b32.xlu0 %v923, 111
        %v929 = vpop.permute.xlu0 %928
        %vm930 = vcmask 908288
        %v931 = vsel %vm930, %v925, %v927
        %v932 = vsel %vm930, %v927, %v929
        %v935 = vsel %vm914, %v931, 0.0
        %v936 = vsel %vm915, %v932, 0.0
        %s937 = scalar_lea.vmem %s1, 32
        %v938 = vld [vmem:[%s937] sm:$0xf]
        %v940 = vsel %vm337, %v938, 0
        %v943 = vsel %vm341, %v935, 0
        %v946 = vsel %vm341, %v936, 0
        %948 = vmatpush.msra.mxu0 0.0
        %949 = vmatpush.msra.mxu0 0.0
        %950 = vmatpush.msra.mxu0 0.0
        %951 = vmatpush.msra.mxu0 0.0
        %952 = vmatpush.msra.mxu0 0.0
        %953 = vmatpush.msra.mxu0 0.0
        %954 = vmatpush.msra.mxu0 0.0
        %955 = vmatpush.msra.mxu0 0.0
        %956 = vmatpush.msra.mxu0 0.0
        %957 = vmatpush.msra.mxu0 0.0
        %958 = vmatpush.msra.mxu0 0.0
        %959 = vmatpush.msra.mxu0 0.0
        %960 = vmatpush.msra.mxu0 0.0
        %961 = vmatpush.msra.mxu0 0.0
        %962 = vmatpush.msra.mxu0 0.0
        %963 = vmatpush.msra.mxu0 %v943
        %964 = vmatmul.f32.gmra.mxu0 %v940
        %v965 = vpop.f32.mrf.mxu0
        %v966 = vadd.f32 0.0, %v965
        %967 = vdwg.mxu0
        %968 = vmatpush.msra.mxu0 0.0
        %969 = vmatpush.msra.mxu0 0.0
        %970 = vmatpush.msra.mxu0 0.0
        %971 = vmatpush.msra.mxu0 0.0
        %972 = vmatpush.msra.mxu0 0.0
        %973 = vmatpush.msra.mxu0 0.0
        %974 = vmatpush.msra.mxu0 0.0
        %975 = vmatpush.msra.mxu0 0.0
        %976 = vmatpush.msra.mxu0 0.0
        %977 = vmatpush.msra.mxu0 0.0
        %978 = vmatpush.msra.mxu0 0.0
        %979 = vmatpush.msra.mxu0 0.0
        %980 = vmatpush.msra.mxu0 0.0
        %981 = vmatpush.msra.mxu0 0.0
        %982 = vmatpush.msra.mxu0 0.0
        %983 = vmatpush.msra.mxu0 %v946
        %984 = vmatmul.f32.gmra.mxu0 %v940
        %v985 = vpop.f32.mrf.mxu0
        %v986 = vadd.f32 0.0, %v985
        %987 = vdwg.mxu0
        %v988 = vadd.f32 %v907, %v966
        %v989 = vadd.f32 %v908, %v986
        %v990 = vld [vmem:[%s2] sm:$0xf]
        %992 = vset.pattern.permute.xlu0 0
        %993 = vperm.xlu0 %992, %v990
        %v994 = vpop.permute.xlu0 %993
        %v996 = vadd.f32 %v988, %v994
        %v997 = vadd.f32 %v989, %v994
        %v998 = vsel %vm341, %v996, 0.0
        %v999 = vsel %vm341, %v997, 0.0
        %v1000 = vadd.f32 %v998, %v999
        %1001 = vadd.xlane.f32.xlu0 %v1000
        %v1002 = vpop.xlane.xlu0 %1001
        %v1003 = vmul.f32 %v1002, 0.00390625
        %v1004 = vsub.f32 %v996, %v1003
        %v1005 = vsub.f32 %v997, %v1003
        %v1006 = vmul.f32 %v1004, %v1004
        %v1007 = vmul.f32 %v1005, %v1005
        %v1008 = vsel %vm341, %v1006, 0.0
        %v1009 = vsel %vm341, %v1007, 0.0
        %v1010 = vadd.f32 %v1008, %v1009
        %1011 = vadd.xlane.f32.xlu0 %v1010
        %v1012 = vpop.xlane.xlu0 %1011
        %v1013 = vmul.f32 %v1012, 0.00390625
        %v1014 = vadd.f32 %v1013, 1e-05
        %v1015 = vrsqrt.pop %v1014
        %v1016 = vmul.f32 %v1015, %v1014
        %v1017 = vmul.f32 %v1016, %v1015
        %v1018 = vmul.f32 0.5, %v1017
        %v1019 = vsub.f32 1.5, %v1018
        %v1020 = vmul.f32 %v1015, %v1019
        %vm1021 = vweird.f32 %v1014
        %vm1022 = vweird.f32 %v1015
        %vm1023 = vmor %vm1021, %vm1022
        %v1024 = vsel %vm1023, %v1015, %v1020
        %v1025 = vmul.f32 %v1004, %v1024
        %v1026 = vmul.f32 %v1005, %v1024
        %v1027 = vmax.f32 %v1025, 0.0
        %v1028 = vmax.f32 %v1026, 0.0
        %v1031 = vrot.slane %v1028, 4
        %v1032 = vsel %vm341, %v1027, %v1031
        %1034 = vst [vmem:[#allocation2 + $0x4] sm:$0xff] %v1032
        %v1035 = vld [vmem:[#allocation2] sm:$0xff]
        %v1036 = vld [vmem:[#allocation2 + $0x8] sm:$0xf]
        %1039 = vst [vmem:[#allocation1] ss:$2 sm:$0xff] %v1035
        %s1040 = scalar_lea.vmem [#allocation1], 16
        %1041 = vst [vmem:[%s1040] ss:$2 sm:$0xff] %v1036
        %v1042 = vld.sshfl [vmem:[#allocation1] sm:$0xff pattern:$0x75316420]
        %v1043 = vld.sshfl [vmem:[#allocation1 + $0x8] sm:$0xff pattern:$0x75316420]
        %v1044 = vld.sshfl [vmem:[#allocation1 + $0x10] sm:$0xff pattern:$0x75316420]
        %1045 = vrot.lane.b32.xlu0 %v1042, 17
        %v1046 = vpop.permute.xlu0 %1045
        %1047 = vrot.lane.b32.xlu0 %v1043, 17
        %v1048 = vpop.permute.xlu0 %1047
        %1049 = vrot.lane.b32.xlu0 %v1044, 17
        %v1050 = vpop.permute.xlu0 %1049
        %v1051 = vsel %vm299, %v1046, %v1048
        %v1052 = vsel %vm299, %v1048, %v1050
        %v1055 = vsel %vm283, %v1051, 0.0
        %v1056 = vsel %vm284, %v1052, 0.0
        %v1057 = vld [vmem:[%s3] sm:$0xf]
        %v1058 = vld [vmem:[#allocation2] sm:$0xff]
        %v1059 = vld [vmem:[#allocation2 + $0x8] sm:$0xf]
        %1062 = vst [vmem:[#allocation1] ss:$2 sm:$0xff] %v1058
        %s1063 = scalar_lea.vmem [#allocation1], 16
        %1064 = vst [vmem:[%s1063] ss:$2 sm:$0xff] %v1059
        %v1065 = vld.sshfl [vmem:[#allocation1] sm:$0xff pattern:$0x75316420]
        %v1066 = vld.sshfl [vmem:[#allocation1 + $0x8] sm:$0xff pattern:$0x75316420]
        %v1067 = vld.sshfl [vmem:[#allocation1 + $0x10] sm:$0xff pattern:$0x75316420]
        %1068 = vrot.lane.b32.xlu0 %v1065, 16
        %v1069 = vpop.permute.xlu0 %1068
        %1070 = vrot.lane.b32.xlu0 %v1066, 16
        %v1071 = vpop.permute.xlu0 %1070
        %1072 = vrot.lane.b32.xlu0 %v1067, 16
        %v1073 = vpop.permute.xlu0 %1072
        %v1074 = vsel %vm328, %v1069, %v1071
        %v1075 = vsel %vm328, %v1071, %v1073
        %v1078 = vsel %vm312, %v1074, 0.0
        %v1079 = vsel %vm313, %v1075, 0.0
        %s1080 = scalar_lea.vmem %s3, 4
        %v1081 = vld [vmem:[%s1080] sm:$0xf]
        %v1083 = vsel %vm337, %v1081, 0
        %v1086 = vsel %vm341, %v1078, 0
        %v1089 = vsel %vm341, %v1079, 0
        %1091 = vmatpush.msra.mxu0 0.0
        %1092 = vmatpush.msra.mxu0 0.0
        %1093 = vmatpush.msra.mxu0 0.0
        %1094 = vmatpush.msra.mxu0 0.0
        %1095 = vmatpush.msra.mxu0 0.0
        %1096 = vmatpush.msra.mxu0 0.0
        %1097 = vmatpush.msra.mxu0 0.0
        %1098 = vmatpush.msra.mxu0 0.0
        %1099 = vmatpush.msra.mxu0 0.0
        %1100 = vmatpush.msra.mxu0 0.0
        %1101 = vmatpush.msra.mxu0 0.0
        %1102 = vmatpush.msra.mxu0 0.0
        %1103 = vmatpush.msra.mxu0 0.0
        %1104 = vmatpush.msra.mxu0 0.0
        %1105 = vmatpush.msra.mxu0 0.0
        %1106 = vmatpush.msra.mxu0 %v1086
        %1107 = vmatmul.f32.gmra.mxu0 %v1083
        %v1108 = vpop.f32.mrf.mxu0
        %v1109 = vadd.f32 0.0, %v1108
        %1110 = vdwg.mxu0
        %1111 = vmatpush.msra.mxu0 0.0
        %1112 = vmatpush.msra.mxu0 0.0
        %1113 = vmatpush.msra.mxu0 0.0
        %1114 = vmatpush.msra.mxu0 0.0
        %1115 = vmatpush.msra.mxu0 0.0
        %1116 = vmatpush.msra.mxu0 0.0
        %1117 = vmatpush.msra.mxu0 0.0
        %1118 = vmatpush.msra.mxu0 0.0
        %1119 = vmatpush.msra.mxu0 0.0
        %1120 = vmatpush.msra.mxu0 0.0
        %1121 = vmatpush.msra.mxu0 0.0
        %1122 = vmatpush.msra.mxu0 0.0
        %1123 = vmatpush.msra.mxu0 0.0
        %1124 = vmatpush.msra.mxu0 0.0
        %1125 = vmatpush.msra.mxu0 0.0
        %1126 = vmatpush.msra.mxu0 %v1089
        %1127 = vmatmul.f32.gmra.mxu0 %v1083
        %v1128 = vpop.f32.mrf.mxu0
        %v1129 = vadd.f32 0.0, %v1128
        %1130 = vdwg.mxu0
        %v1132 = vsel %vm337, %v1057, 0
        %v1135 = vsel %vm341, %v1055, 0
        %v1138 = vsel %vm341, %v1056, 0
        %1140 = vmatpush.msra.mxu0 0.0
        %1141 = vmatpush.msra.mxu0 0.0
        %1142 = vmatpush.msra.mxu0 0.0
        %1143 = vmatpush.msra.mxu0 0.0
        %1144 = vmatpush.msra.mxu0 0.0
        %1145 = vmatpush.msra.mxu0 0.0
        %1146 = vmatpush.msra.mxu0 0.0
        %1147 = vmatpush.msra.mxu0 0.0
        %1148 = vmatpush.msra.mxu0 0.0
        %1149 = vmatpush.msra.mxu0 0.0
        %1150 = vmatpush.msra.mxu0 0.0
        %1151 = vmatpush.msra.mxu0 0.0
        %1152 = vmatpush.msra.mxu0 0.0
        %1153 = vmatpush.msra.mxu0 0.0
        %1154 = vmatpush.msra.mxu0 0.0
        %1155 = vmatpush.msra.mxu0 %v1135
        %1156 = vmatmul.f32.gmra.mxu0 %v1132
        %v1157 = vpop.f32.mrf.mxu0
        %v1158 = vadd.f32 %v1109, %v1157
        %1159 = vdwg.mxu0
        %1160 = vmatpush.msra.mxu0 0.0
        %1161 = vmatpush.msra.mxu0 0.0
        %1162 = vmatpush.msra.mxu0 0.0
        %1163 = vmatpush.msra.mxu0 0.0
        %1164 = vmatpush.msra.mxu0 0.0
        %1165 = vmatpush.msra.mxu0 0.0
        %1166 = vmatpush.msra.mxu0 0.0
        %1167 = vmatpush.msra.mxu0 0.0
        %1168 = vmatpush.msra.mxu0 0.0
        %1169 = vmatpush.msra.mxu0 0.0
        %1170 = vmatpush.msra.mxu0 0.0
        %1171 = vmatpush.msra.mxu0 0.0
        %1172 = vmatpush.msra.mxu0 0.0
        %1173 = vmatpush.msra.mxu0 0.0
        %1174 = vmatpush.msra.mxu0 0.0
        %1175 = vmatpush.msra.mxu0 %v1138
        %1176 = vmatmul.f32.gmra.mxu0 %v1132
        %v1177 = vpop.f32.mrf.mxu0
        %v1178 = vadd.f32 %v1129, %v1177
        %1179 = vdwg.mxu0
        %v1180 = vld [vmem:[#allocation2] sm:$0xff]
        %v1181 = vld [vmem:[#allocation2 + $0x8] sm:$0xf]
        %1184 = vst [vmem:[#allocation1] ss:$2 sm:$0xff] %v1180
        %s1185 = scalar_lea.vmem [#allocation1], 16
        %1186 = vst [vmem:[%s1185] ss:$2 sm:$0xff] %v1181
        %v1187 = vld.sshfl [vmem:[#allocation1] sm:$0xff pattern:$0x75316420]
        %v1188 = vld.sshfl [vmem:[#allocation1 + $0x8] sm:$0xff pattern:$0x75316420]
        %v1189 = vld.sshfl [vmem:[#allocation1 + $0x10] sm:$0xff pattern:$0x75316420]
        %1190 = vrot.lane.b32.xlu0 %v1187, 15
        %v1191 = vpop.permute.xlu0 %1190
        %1192 = vrot.lane.b32.xlu0 %v1188, 15
        %v1193 = vpop.permute.xlu0 %1192
        %1194 = vrot.lane.b32.xlu0 %v1189, 15
        %v1195 = vpop.permute.xlu0 %1194
        %v1196 = vsel %vm458, %v1191, %v1193
        %v1197 = vsel %vm458, %v1193, %v1195
        %v1200 = vsel %vm442, %v1196, 0.0
        %v1201 = vsel %vm443, %v1197, 0.0
        %s1202 = scalar_lea.vmem %s3, 8
        %v1203 = vld [vmem:[%s1202] sm:$0xf]
        %v1205 = vsel %vm337, %v1203, 0
        %v1208 = vsel %vm341, %v1200, 0
        %v1211 = vsel %vm341, %v1201, 0
        %1213 = vmatpush.msra.mxu0 0.0
        %1214 = vmatpush.msra.mxu0 0.0
        %1215 = vmatpush.msra.mxu0 0.0
        %1216 = vmatpush.msra.mxu0 0.0
        %1217 = vmatpush.msra.mxu0 0.0
        %1218 = vmatpush.msra.mxu0 0.0
        %1219 = vmatpush.msra.mxu0 0.0
        %1220 = vmatpush.msra.mxu0 0.0
        %1221 = vmatpush.msra.mxu0 0.0
        %1222 = vmatpush.msra.mxu0 0.0
        %1223 = vmatpush.msra.mxu0 0.0
        %1224 = vmatpush.msra.mxu0 0.0
        %1225 = vmatpush.msra.mxu0 0.0
        %1226 = vmatpush.msra.mxu0 0.0
        %1227 = vmatpush.msra.mxu0 0.0
        %1228 = vmatpush.msra.mxu0 %v1208
        %1229 = vmatmul.f32.gmra.mxu0 %v1205
        %v1230 = vpop.f32.mrf.mxu0
        %v1231 = vadd.f32 0.0, %v1230
        %1232 = vdwg.mxu0
        %1233 = vmatpush.msra.mxu0 0.0
        %1234 = vmatpush.msra.mxu0 0.0
        %1235 = vmatpush.msra.mxu0 0.0
        %1236 = vmatpush.msra.mxu0 0.0
        %1237 = vmatpush.msra.mxu0 0.0
        %1238 = vmatpush.msra.mxu0 0.0
        %1239 = vmatpush.msra.mxu0 0.0
        %1240 = vmatpush.msra.mxu0 0.0
        %1241 = vmatpush.msra.mxu0 0.0
        %1242 = vmatpush.msra.mxu0 0.0
        %1243 = vmatpush.msra.mxu0 0.0
        %1244 = vmatpush.msra.mxu0 0.0
        %1245 = vmatpush.msra.mxu0 0.0
        %1246 = vmatpush.msra.mxu0 0.0
        %1247 = vmatpush.msra.mxu0 0.0
        %1248 = vmatpush.msra.mxu0 %v1211
        %1249 = vmatmul.f32.gmra.mxu0 %v1205
        %v1250 = vpop.f32.mrf.mxu0
        %v1251 = vadd.f32 0.0, %v1250
        %1252 = vdwg.mxu0
        %v1253 = vadd.f32 %v1158, %v1231
        %v1254 = vadd.f32 %v1178, %v1251
        %v1255 = vld [vmem:[#allocation2] sm:$0xff]
        %v1256 = vld [vmem:[#allocation2 + $0x8] sm:$0xf]
        %1259 = vst [vmem:[#allocation1] ss:$2 sm:$0xff] %v1255
        %s1260 = scalar_lea.vmem [#allocation1], 16
        %1261 = vst [vmem:[%s1260] ss:$2 sm:$0xff] %v1256
        %v1262 = vld.sshfl [vmem:[#allocation1] sm:$0xff pattern:$0x75316420]
        %v1263 = vld.sshfl [vmem:[#allocation1 + $0x8] sm:$0xff pattern:$0x75316420]
        %v1264 = vld.sshfl [vmem:[#allocation1 + $0x10] sm:$0xff pattern:$0x75316420]
        %1265 = vrot.lane.b32.xlu0 %v1262, 1
        %v1266 = vpop.permute.xlu0 %1265
        %1267 = vrot.lane.b32.xlu0 %v1263, 1
        %v1268 = vpop.permute.xlu0 %1267
        %1269 = vrot.lane.b32.xlu0 %v1264, 1
        %v1270 = vpop.permute.xlu0 %1269
        %v1271 = vsel %vm539, %v1266, %v1268
        %v1272 = vsel %vm539, %v1268, %v1270
        %v1275 = vsel %vm523, %v1271, 0.0
        %v1276 = vsel %vm524, %v1272, 0.0
        %s1277 = scalar_lea.vmem %s3, 12
        %v1278 = vld [vmem:[%s1277] sm:$0xf]
        %v1280 = vsel %vm337, %v1278, 0
        %v1283 = vsel %vm341, %v1275, 0
        %v1286 = vsel %vm341, %v1276, 0
        %1288 = vmatpush.msra.mxu0 0.0
        %1289 = vmatpush.msra.mxu0 0.0
        %1290 = vmatpush.msra.mxu0 0.0
        %1291 = vmatpush.msra.mxu0 0.0
        %1292 = vmatpush.msra.mxu0 0.0
        %1293 = vmatpush.msra.mxu0 0.0
        %1294 = vmatpush.msra.mxu0 0.0
        %1295 = vmatpush.msra.mxu0 0.0
        %1296 = vmatpush.msra.mxu0 0.0
        %1297 = vmatpush.msra.mxu0 0.0
        %1298 = vmatpush.msra.mxu0 0.0
        %1299 = vmatpush.msra.mxu0 0.0
        %1300 = vmatpush.msra.mxu0 0.0
        %1301 = vmatpush.msra.mxu0 0.0
        %1302 = vmatpush.msra.mxu0 0.0
        %1303 = vmatpush.msra.mxu0 %v1283
        %1304 = vmatmul.f32.gmra.mxu0 %v1280
        %v1305 = vpop.f32.mrf.mxu0
        %v1306 = vadd.f32 0.0, %v1305
        %1307 = vdwg.mxu0
        %1308 = vmatpush.msra.mxu0 0.0
        %1309 = vmatpush.msra.mxu0 0.0
        %1310 = vmatpush.msra.mxu0 0.0
        %1311 = vmatpush.msra.mxu0 0.0
        %1312 = vmatpush.msra.mxu0 0.0
        %1313 = vmatpush.msra.mxu0 0.0
        %1314 = vmatpush.msra.mxu0 0.0
        %1315 = vmatpush.msra.mxu0 0.0
        %1316 = vmatpush.msra.mxu0 0.0
        %1317 = vmatpush.msra.mxu0 0.0
        %1318 = vmatpush.msra.mxu0 0.0
        %1319 = vmatpush.msra.mxu0 0.0
        %1320 = vmatpush.msra.mxu0 0.0
        %1321 = vmatpush.msra.mxu0 0.0
        %1322 = vmatpush.msra.mxu0 0.0
        %1323 = vmatpush.msra.mxu0 %v1286
        %1324 = vmatmul.f32.gmra.mxu0 %v1280
        %v1325 = vpop.f32.mrf.mxu0
        %v1326 = vadd.f32 0.0, %v1325
        %1327 = vdwg.mxu0
        %v1328 = vadd.f32 %v1253, %v1306
        %v1329 = vadd.f32 %v1254, %v1326
        %v1330 = vld [vmem:[#allocation2 + $0x4] sm:$0xff]
        %1332 = vst [vmem:[#allocation1] ss:$2 sm:$0xff] %v1330
        %v1333 = vld.sshfl [vmem:[#allocation1] sm:$0xff pattern:$0x75316420]
        %v1334 = vld.sshfl [vmem:[#allocation1 + $0x8] sm:$0xff pattern:$0x75316420]
        %v1337 = vsel %vm603, %v1333, 0.0
        %v1338 = vsel %vm604, %v1334, 0.0
        %s1339 = scalar_lea.vmem %s3, 16
        %v1340 = vld [vmem:[%s1339] sm:$0xf]
        %v1342 = vsel %vm337, %v1340, 0
        %v1345 = vsel %vm341, %v1337, 0
        %v1348 = vsel %vm341, %v1338, 0
        %1350 = vmatpush.msra.mxu0 0.0
        %1351 = vmatpush.msra.mxu0 0.0
        %1352 = vmatpush.msra.mxu0 0.0
        %1353 = vmatpush.msra.mxu0 0.0
        %1354 = vmatpush.msra.mxu0 0.0
        %1355 = vmatpush.msra.mxu0 0.0
        %1356 = vmatpush.msra.mxu0 0.0
        %1357 = vmatpush.msra.mxu0 0.0
        %1358 = vmatpush.msra.mxu0 0.0
        %1359 = vmatpush.msra.mxu0 0.0
        %1360 = vmatpush.msra.mxu0 0.0
        %1361 = vmatpush.msra.mxu0 0.0
        %1362 = vmatpush.msra.mxu0 0.0
        %1363 = vmatpush.msra.mxu0 0.0
        %1364 = vmatpush.msra.mxu0 0.0
        %1365 = vmatpush.msra.mxu0 %v1345
        %1366 = vmatmul.f32.gmra.mxu0 %v1342
        %v1367 = vpop.f32.mrf.mxu0
        %v1368 = vadd.f32 0.0, %v1367
        %1369 = vdwg.mxu0
        %1370 = vmatpush.msra.mxu0 0.0
        %1371 = vmatpush.msra.mxu0 0.0
        %1372 = vmatpush.msra.mxu0 0.0
        %1373 = vmatpush.msra.mxu0 0.0
        %1374 = vmatpush.msra.mxu0 0.0
        %1375 = vmatpush.msra.mxu0 0.0
        %1376 = vmatpush.msra.mxu0 0.0
        %1377 = vmatpush.msra.mxu0 0.0
        %1378 = vmatpush.msra.mxu0 0.0
        %1379 = vmatpush.msra.mxu0 0.0
        %1380 = vmatpush.msra.mxu0 0.0
        %1381 = vmatpush.msra.mxu0 0.0
        %1382 = vmatpush.msra.mxu0 0.0
        %1383 = vmatpush.msra.mxu0 0.0
        %1384 = vmatpush.msra.mxu0 0.0
        %1385 = vmatpush.msra.mxu0 %v1348
        %1386 = vmatmul.f32.gmra.mxu0 %v1342
        %v1387 = vpop.f32.mrf.mxu0
        %v1388 = vadd.f32 0.0, %v1387
        %1389 = vdwg.mxu0
        %v1390 = vadd.f32 %v1328, %v1368
        %v1391 = vadd.f32 %v1329, %v1388
        %v1392 = vld [vmem:[#allocation2 + $0x4] sm:$0xff]
        %v1393 = vld [vmem:[#allocation2 + $0xc] sm:$0xf]
        %1396 = vst [vmem:[#allocation1] ss:$2 sm:$0xff] %v1392
        %s1397 = scalar_lea.vmem [#allocation1], 16
        %1398 = vst [vmem:[%s1397] ss:$2 sm:$0xff] %v1393
        %v1399 = vld.sshfl [vmem:[#allocation1] sm:$0xff pattern:$0x75316420]
        %v1400 = vld.sshfl [vmem:[#allocation1 + $0x8] sm:$0xff pattern:$0x75316420]
        %v1401 = vld.sshfl [vmem:[#allocation1 + $0x10] sm:$0xff pattern:$0x75316420]
        %1402 = vrot.lane.b32.xlu0 %v1399, 127
        %v1403 = vpop.permute.xlu0 %1402
        %1404 = vrot.lane.b32.xlu0 %v1400, 127
        %v1405 = vpop.permute.xlu0 %1404
        %1406 = vrot.lane.b32.xlu0 %v1401, 127
        %v1407 = vpop.permute.xlu0 %1406
        %v1408 = vsel %vm687, %v1403, %v1405
        %v1409 = vsel %vm687, %v1405, %v1407
        %v1412 = vsel %vm671, %v1408, 0.0
        %v1413 = vsel %vm672, %v1409, 0.0
        %s1414 = scalar_lea.vmem %s3, 20
        %v1415 = vld [vmem:[%s1414] sm:$0xf]
        %v1417 = vsel %vm337, %v1415, 0
        %v1420 = vsel %vm341, %v1412, 0
        %v1423 = vsel %vm341, %v1413, 0
        %1425 = vmatpush.msra.mxu0 0.0
        %1426 = vmatpush.msra.mxu0 0.0
        %1427 = vmatpush.msra.mxu0 0.0
        %1428 = vmatpush.msra.mxu0 0.0
        %1429 = vmatpush.msra.mxu0 0.0
        %1430 = vmatpush.msra.mxu0 0.0
        %1431 = vmatpush.msra.mxu0 0.0
        %1432 = vmatpush.msra.mxu0 0.0
        %1433 = vmatpush.msra.mxu0 0.0
        %1434 = vmatpush.msra.mxu0 0.0
        %1435 = vmatpush.msra.mxu0 0.0
        %1436 = vmatpush.msra.mxu0 0.0
        %1437 = vmatpush.msra.mxu0 0.0
        %1438 = vmatpush.msra.mxu0 0.0
        %1439 = vmatpush.msra.mxu0 0.0
        %1440 = vmatpush.msra.mxu0 %v1420
        %1441 = vmatmul.f32.gmra.mxu0 %v1417
        %v1442 = vpop.f32.mrf.mxu0
        %v1443 = vadd.f32 0.0, %v1442
        %1444 = vdwg.mxu0
        %1445 = vmatpush.msra.mxu0 0.0
        %1446 = vmatpush.msra.mxu0 0.0
        %1447 = vmatpush.msra.mxu0 0.0
        %1448 = vmatpush.msra.mxu0 0.0
        %1449 = vmatpush.msra.mxu0 0.0
        %1450 = vmatpush.msra.mxu0 0.0
        %1451 = vmatpush.msra.mxu0 0.0
        %1452 = vmatpush.msra.mxu0 0.0
        %1453 = vmatpush.msra.mxu0 0.0
        %1454 = vmatpush.msra.mxu0 0.0
        %1455 = vmatpush.msra.mxu0 0.0
        %1456 = vmatpush.msra.mxu0 0.0
        %1457 = vmatpush.msra.mxu0 0.0
        %1458 = vmatpush.msra.mxu0 0.0
        %1459 = vmatpush.msra.mxu0 0.0
        %1460 = vmatpush.msra.mxu0 %v1423
        %1461 = vmatmul.f32.gmra.mxu0 %v1417
        %v1462 = vpop.f32.mrf.mxu0
        %v1463 = vadd.f32 0.0, %v1462
        %1464 = vdwg.mxu0
        %v1465 = vadd.f32 %v1390, %v1443
        %v1466 = vadd.f32 %v1391, %v1463
        %v1467 = vld [vmem:[#allocation2 + $0x4] sm:$0xff]
        %v1468 = vld [vmem:[#allocation2 + $0xc] sm:$0xf]
        %1471 = vst [vmem:[#allocation1] ss:$2 sm:$0xff] %v1467
        %s1472 = scalar_lea.vmem [#allocation1], 16
        %1473 = vst [vmem:[%s1472] ss:$2 sm:$0xff] %v1468
        %v1474 = vld.sshfl [vmem:[#allocation1] sm:$0xff pattern:$0x75316420]
        %v1475 = vld.sshfl [vmem:[#allocation1 + $0x8] sm:$0xff pattern:$0x75316420]
        %v1476 = vld.sshfl [vmem:[#allocation1 + $0x10] sm:$0xff pattern:$0x75316420]
        %1477 = vrot.lane.b32.xlu0 %v1474, 113
        %v1478 = vpop.permute.xlu0 %1477
        %1479 = vrot.lane.b32.xlu0 %v1475, 113
        %v1480 = vpop.permute.xlu0 %1479
        %1481 = vrot.lane.b32.xlu0 %v1476, 113
        %v1482 = vpop.permute.xlu0 %1481
        %v1483 = vsel %vm768, %v1478, %v1480
        %v1484 = vsel %vm768, %v1480, %v1482
        %v1487 = vsel %vm752, %v1483, 0.0
        %v1488 = vsel %vm753, %v1484, 0.0
        %s1489 = scalar_lea.vmem %s3, 24
        %v1490 = vld [vmem:[%s1489] sm:$0xf]
        %v1492 = vsel %vm337, %v1490, 0
        %v1495 = vsel %vm341, %v1487, 0
        %v1498 = vsel %vm341, %v1488, 0
        %1500 = vmatpush.msra.mxu0 0.0
        %1501 = vmatpush.msra.mxu0 0.0
        %1502 = vmatpush.msra.mxu0 0.0
        %1503 = vmatpush.msra.mxu0 0.0
        %1504 = vmatpush.msra.mxu0 0.0
        %1505 = vmatpush.msra.mxu0 0.0
        %1506 = vmatpush.msra.mxu0 0.0
        %1507 = vmatpush.msra.mxu0 0.0
        %1508 = vmatpush.msra.mxu0 0.0
        %1509 = vmatpush.msra.mxu0 0.0
        %1510 = vmatpush.msra.mxu0 0.0
        %1511 = vmatpush.msra.mxu0 0.0
        %1512 = vmatpush.msra.mxu0 0.0
        %1513 = vmatpush.msra.mxu0 0.0
        %1514 = vmatpush.msra.mxu0 0.0
        %1515 = vmatpush.msra.mxu0 %v1495
        %1516 = vmatmul.f32.gmra.mxu0 %v1492
        %v1517 = vpop.f32.mrf.mxu0
        %v1518 = vadd.f32 0.0, %v1517
        %1519 = vdwg.mxu0
        %1520 = vmatpush.msra.mxu0 0.0
        %1521 = vmatpush.msra.mxu0 0.0
        %1522 = vmatpush.msra.mxu0 0.0
        %1523 = vmatpush.msra.mxu0 0.0
        %1524 = vmatpush.msra.mxu0 0.0
        %1525 = vmatpush.msra.mxu0 0.0
        %1526 = vmatpush.msra.mxu0 0.0
        %1527 = vmatpush.msra.mxu0 0.0
        %1528 = vmatpush.msra.mxu0 0.0
        %1529 = vmatpush.msra.mxu0 0.0
        %1530 = vmatpush.msra.mxu0 0.0
        %1531 = vmatpush.msra.mxu0 0.0
        %1532 = vmatpush.msra.mxu0 0.0
        %1533 = vmatpush.msra.mxu0 0.0
        %1534 = vmatpush.msra.mxu0 0.0
        %1535 = vmatpush.msra.mxu0 %v1498
        %1536 = vmatmul.f32.gmra.mxu0 %v1492
        %v1537 = vpop.f32.mrf.mxu0
        %v1538 = vadd.f32 0.0, %v1537
        %1539 = vdwg.mxu0
        %v1540 = vadd.f32 %v1465, %v1518
        %v1541 = vadd.f32 %v1466, %v1538
        %v1542 = vld [vmem:[#allocation2 + $0x4] sm:$0xff]
        %v1543 = vld [vmem:[#allocation2 + $0xc] sm:$0xf]
        %1546 = vst [vmem:[#allocation1] ss:$2 sm:$0xff] %v1542
        %s1547 = scalar_lea.vmem [#allocation1], 16
        %1548 = vst [vmem:[%s1547] ss:$2 sm:$0xff] %v1543
        %v1549 = vld.sshfl [vmem:[#allocation1] sm:$0xff pattern:$0x75316420]
        %v1550 = vld.sshfl [vmem:[#allocation1 + $0x8] sm:$0xff pattern:$0x75316420]
        %v1551 = vld.sshfl [vmem:[#allocation1 + $0x10] sm:$0xff pattern:$0x75316420]
        %1552 = vrot.lane.b32.xlu0 %v1549, 112
        %v1553 = vpop.permute.xlu0 %1552
        %1554 = vrot.lane.b32.xlu0 %v1550, 112
        %v1555 = vpop.permute.xlu0 %1554
        %1556 = vrot.lane.b32.xlu0 %v1551, 112
        %v1557 = vpop.permute.xlu0 %1556
        %v1558 = vsel %vm849, %v1553, %v1555
        %v1559 = vsel %vm849, %v1555, %v1557
        %v1562 = vsel %vm833, %v1558, 0.0
        %v1563 = vsel %vm834, %v1559, 0.0
        %s1564 = scalar_lea.vmem %s3, 28
        %v1565 = vld [vmem:[%s1564] sm:$0xf]
        %v1567 = vsel %vm337, %v1565, 0
        %v1570 = vsel %vm341, %v1562, 0
        %v1573 = vsel %vm341, %v1563, 0
        %1575 = vmatpush.msra.mxu0 0.0
        %1576 = vmatpush.msra.mxu0 0.0
        %1577 = vmatpush.msra.mxu0 0.0
        %1578 = vmatpush.msra.mxu0 0.0
        %1579 = vmatpush.msra.mxu0 0.0
        %1580 = vmatpush.msra.mxu0 0.0
        %1581 = vmatpush.msra.mxu0 0.0
        %1582 = vmatpush.msra.mxu0 0.0
        %1583 = vmatpush.msra.mxu0 0.0
        %1584 = vmatpush.msra.mxu0 0.0
        %1585 = vmatpush.msra.mxu0 0.0
        %1586 = vmatpush.msra.mxu0 0.0
        %1587 = vmatpush.msra.mxu0 0.0
        %1588 = vmatpush.msra.mxu0 0.0
        %1589 = vmatpush.msra.mxu0 0.0
        %1590 = vmatpush.msra.mxu0 %v1570
        %1591 = vmatmul.f32.gmra.mxu0 %v1567
        %v1592 = vpop.f32.mrf.mxu0
        %v1593 = vadd.f32 0.0, %v1592
        %1594 = vdwg.mxu0
        %1595 = vmatpush.msra.mxu0 0.0
        %1596 = vmatpush.msra.mxu0 0.0
        %1597 = vmatpush.msra.mxu0 0.0
        %1598 = vmatpush.msra.mxu0 0.0
        %1599 = vmatpush.msra.mxu0 0.0
        %1600 = vmatpush.msra.mxu0 0.0
        %1601 = vmatpush.msra.mxu0 0.0
        %1602 = vmatpush.msra.mxu0 0.0
        %1603 = vmatpush.msra.mxu0 0.0
        %1604 = vmatpush.msra.mxu0 0.0
        %1605 = vmatpush.msra.mxu0 0.0
        %1606 = vmatpush.msra.mxu0 0.0
        %1607 = vmatpush.msra.mxu0 0.0
        %1608 = vmatpush.msra.mxu0 0.0
        %1609 = vmatpush.msra.mxu0 0.0
        %1610 = vmatpush.msra.mxu0 %v1573
        %1611 = vmatmul.f32.gmra.mxu0 %v1567
        %v1612 = vpop.f32.mrf.mxu0
        %v1613 = vadd.f32 0.0, %v1612
        %1614 = vdwg.mxu0
        %v1615 = vadd.f32 %v1540, %v1593
        %v1616 = vadd.f32 %v1541, %v1613
        %v1617 = vld [vmem:[#allocation2 + $0x4] sm:$0xff]
        %v1618 = vld [vmem:[#allocation2 + $0xc] sm:$0xf]
        %1621 = vst [vmem:[#allocation1] ss:$2 sm:$0xff] %v1617
        %s1622 = scalar_lea.vmem [#allocation1], 16
        %1623 = vst [vmem:[%s1622] ss:$2 sm:$0xff] %v1618
        %v1624 = vld.sshfl [vmem:[#allocation1] sm:$0xff pattern:$0x75316420]
        %v1625 = vld.sshfl [vmem:[#allocation1 + $0x8] sm:$0xff pattern:$0x75316420]
        %v1626 = vld.sshfl [vmem:[#allocation1 + $0x10] sm:$0xff pattern:$0x75316420]
        %1627 = vrot.lane.b32.xlu0 %v1624, 111
        %v1628 = vpop.permute.xlu0 %1627
        %1629 = vrot.lane.b32.xlu0 %v1625, 111
        %v1630 = vpop.permute.xlu0 %1629
        %1631 = vrot.lane.b32.xlu0 %v1626, 111
        %v1632 = vpop.permute.xlu0 %1631
        %v1633 = vsel %vm930, %v1628, %v1630
        %v1634 = vsel %vm930, %v1630, %v1632
        %v1637 = vsel %vm914, %v1633, 0.0
        %v1638 = vsel %vm915, %v1634, 0.0
        %s1639 = scalar_lea.vmem %s3, 32
        %v1640 = vld [vmem:[%s1639] sm:$0xf]
        %v1642 = vsel %vm337, %v1640, 0
        %v1645 = vsel %vm341, %v1637, 0
        %v1648 = vsel %vm341, %v1638, 0
        %1650 = vmatpush.msra.mxu0 0.0
        %1651 = vmatpush.msra.mxu0 0.0
        %1652 = vmatpush.msra.mxu0 0.0
        %1653 = vmatpush.msra.mxu0 0.0
        %1654 = vmatpush.msra.mxu0 0.0
        %1655 = vmatpush.msra.mxu0 0.0
        %1656 = vmatpush.msra.mxu0 0.0
        %1657 = vmatpush.msra.mxu0 0.0
        %1658 = vmatpush.msra.mxu0 0.0
        %1659 = vmatpush.msra.mxu0 0.0
        %1660 = vmatpush.msra.mxu0 0.0
        %1661 = vmatpush.msra.mxu0 0.0
        %1662 = vmatpush.msra.mxu0 0.0
        %1663 = vmatpush.msra.mxu0 0.0
        %1664 = vmatpush.msra.mxu0 0.0
        %1665 = vmatpush.msra.mxu0 %v1645
        %1666 = vmatmul.f32.gmra.mxu0 %v1642
        %v1667 = vpop.f32.mrf.mxu0
        %v1668 = vadd.f32 0.0, %v1667
        %1669 = vdwg.mxu0
        %1670 = vmatpush.msra.mxu0 0.0
        %1671 = vmatpush.msra.mxu0 0.0
        %1672 = vmatpush.msra.mxu0 0.0
        %1673 = vmatpush.msra.mxu0 0.0
        %1674 = vmatpush.msra.mxu0 0.0
        %1675 = vmatpush.msra.mxu0 0.0
        %1676 = vmatpush.msra.mxu0 0.0
        %1677 = vmatpush.msra.mxu0 0.0
        %1678 = vmatpush.msra.mxu0 0.0
        %1679 = vmatpush.msra.mxu0 0.0
        %1680 = vmatpush.msra.mxu0 0.0
        %1681 = vmatpush.msra.mxu0 0.0
        %1682 = vmatpush.msra.mxu0 0.0
        %1683 = vmatpush.msra.mxu0 0.0
        %1684 = vmatpush.msra.mxu0 0.0
        %1685 = vmatpush.msra.mxu0 %v1648
        %1686 = vmatmul.f32.gmra.mxu0 %v1642
        %v1687 = vpop.f32.mrf.mxu0
        %v1688 = vadd.f32 0.0, %v1687
        %1689 = vdwg.mxu0
        %v1690 = vadd.f32 %v1615, %v1668
        %v1691 = vadd.f32 %v1616, %v1688
        %v1692 = vld [vmem:[%s4] sm:$0xf]
        %1694 = vset.pattern.permute.xlu0 0
        %1695 = vperm.xlu0 %1694, %v1692
        %v1696 = vpop.permute.xlu0 %1695
        %v1698 = vadd.f32 %v1690, %v1696
        %v1699 = vadd.f32 %v1691, %v1696
        %v1700 = vsel %vm341, %v1698, 0.0
        %v1701 = vsel %vm341, %v1699, 0.0
        %v1702 = vadd.f32 %v1700, %v1701
        %1703 = vadd.xlane.f32.xlu0 %v1702
        %v1704 = vpop.xlane.xlu0 %1703
        %v1705 = vmul.f32 %v1704, 0.00390625
        %v1706 = vsub.f32 %v1698, %v1705
        %v1707 = vsub.f32 %v1699, %v1705
        %v1708 = vmul.f32 %v1706, %v1706
        %v1709 = vmul.f32 %v1707, %v1707
        %v1710 = vsel %vm341, %v1708, 0.0
        %v1711 = vsel %vm341, %v1709, 0.0
        %v1712 = vadd.f32 %v1710, %v1711
        %1713 = vadd.xlane.f32.xlu0 %v1712
        %v1714 = vpop.xlane.xlu0 %1713
        %v1715 = vmul.f32 %v1714, 0.00390625
        %v1716 = vadd.f32 %v1715, 1e-05
        %v1717 = vrsqrt.pop %v1716
        %v1718 = vmul.f32 %v1717, %v1716
        %v1719 = vmul.f32 %v1718, %v1717
        %v1720 = vmul.f32 0.5, %v1719
        %v1721 = vsub.f32 1.5, %v1720
        %v1722 = vmul.f32 %v1717, %v1721
        %vm1723 = vweird.f32 %v1716
        %vm1724 = vweird.f32 %v1717
        %vm1725 = vmor %vm1723, %vm1724
        %v1726 = vsel %vm1725, %v1717, %v1722
        %v1727 = vmul.f32 %v1706, %v1726
        %v1728 = vmul.f32 %v1707, %v1726
        %v1731 = vrot.slane %v1728, 4
        %v1732 = vsel %vm341, %v1727, %v1731
        %v1734 = vadd.f32 %v276, %v1732
        %1735 = vst [vmem:[%s244] sm:$0xff] %v1734
        %s1736 = sand.u32 %s159, 1
        %s1737 = scalar_lea.sflag [#allocation4], %s1736
        %s1738 = sand.u32 %s159, 1
        %s1739 = smul.addr %s1738, 8
        %s1740 = scalar_lea.vmem [#allocation3], %s1739
        // Predicated region
        $region45: #{tpu_custom_call.1} parent=43 // pred_check
          %p1741 = pneg %p169
        $region46: #{tpu_custom_call.1} parent=43 // pred_check_branch
          %1743 = sbr.rel (%p1741) target = $region48
        $region47: #{tpu_custom_call.1} parent=43 // pred_region
          %1745 = vsyncadd %s1737, 0
          %s1746 = smul.addr %s20, 2
          %s1747 = smul.addr %s1746, 4
          %s1748 = scalar_lea.hbm %s6, %s1747
          %s1750 = sshll.u32 %s1740, 4
          %s1751 = int_to_ptr.vmem [resolvable:$true] %s1750
          %s1752 = sshll.u32 %s1748, 4
          %s1753 = int_to_ptr.hbm [resolvable:$true] %s1752
          %1755 = dma.vmem_to_hbm [thread:$0]  %s1751, 128, %s1753, %s1737
        $region48: #{tpu_custom_call.1} parent=43 // pred_fallthru
          _
      $region44: #{tpu_custom_call.1} parent=5 // pred_fallthru
        _
      %p1756 = scmp.le.s32.totalorder 2, %s15
      // Predicated region
      $region49: #{tpu_custom_call.1} parent=5 // pred_check
        %p1757 = pneg %p1756
      $region50: #{tpu_custom_call.1} parent=5 // pred_check_branch
        %1759 = sbr.rel (%p1757) target = $region52
      $region51: #{tpu_custom_call.1} parent=5 // pred_region
        %s1760 = ssub.s32 %s15, 2
        // Predicated region
        $region53: #{tpu_custom_call.1} parent=51 // pred_check
          %p1761 = pneg %p175
        $region54: #{tpu_custom_call.1} parent=51 // pred_check_branch
          %1763 = sbr.rel (%p1761) target = $region56
        $region55: #{tpu_custom_call.1} parent=51 // pred_region
          %s1764 = sand.u32 %s160, 1
          %s1765 = scalar_lea.sflag [#allocation4], %s1764
          %s1766 = sand.u32 %s160, 1
          %s1767 = smul.addr %s1766, 8
          %s1768 = scalar_lea.vmem [#allocation3], %s1767
          %1770 = dma.done %s1765, 128
        $region56: #{tpu_custom_call.1} parent=51 // pred_fallthru
          _
      $region52: #{tpu_custom_call.1} parent=5 // pred_fallthru
        _
    $region6: #{tpu_custom_call.1} parent=1 // loop_footer
      %s19 = sadd.s32 1, %s15
    $region7: #{tpu_custom_call.1} parent=1 // loop_footer_branch
      %14 = sbr.rel target = $region3
    $region8: #{tpu_custom_call.1} parent=1 // loop_exit
      _
    %1771 = vsyncpa [#allocation4], 1
    %s1772 = scalar_lea.sflag [#allocation4], 1
    %1773 = vsyncpa %s1772, 1

</llo_original>
